<compile_context>
chip_gen: v6e
topology: v6e:2x2x1
jax: 0.10.0
libtpu: 0.0.40
codegen_flags: <defaults>
</compile_context>

<pallas_src>
import functools

import jax
import jax.numpy as jnp
import numpy as np
from jax import lax
from jax.experimental import pallas as pl
from jax.experimental.pallas import tpu as pltpu


def readout_kernel(ids_ref, nin_ref, nout_ref, w_in_ref, w_out_ref,
                   bg_ref, bt_ref, nodewise_ref, graph_ref, acc_ref,
                   *, num_graphs):
    j = pl.program_id(1)                       # node-tile index within shard

    # Per-shard graph accumulator lives in VMEM scratch across the node axis.
    @pl.when(j == 0)
    def _():
        acc_ref[...] = jnp.zeros_like(acc_ref)

    nin = nin_ref[...]                         # (TN, H) f32
    nout = nout_ref[...]                       # (TN, H) f32

    # Contract the feature axis of both operands: (C|2C, H) x (TN, H)^T,
    # producing lane-dense (rows, TN) results directly.
    dn = (((1,), (1,)), ((), ()))
    gate_in = lax.dot_general(w_in_ref[...], nin, dn,
                              preferred_element_type=jnp.float32)    # (C, TN)
    packed = lax.dot_general(w_out_ref[...], nout, dn,
                             preferred_element_type=jnp.float32)     # (2C, TN)
    nc = gate_in.shape[0]

    # gating = sigmoid(regression_gate(cat(nin, nout)))  (concat removed by
    # splitting the gate weight; nout gate half fused with the transform).
    gating = jax.nn.sigmoid(gate_in + packed[:nc] + bg_ref[...])     # (C, TN)
    nodewise = gating * (packed[nc:] + bt_ref[...])                  # (C, TN)
    nodewise_ref[...] = nodewise                # unmasked vst, contiguous DMA

    # graph_readout.index_add_(0, graph_nodes_list, nodewise_readout) as a
    # one-hot MXU matmul.  Padded / clamped / garbage columns carry a sentinel
    # id >= num_graphs and are zeroed before the contraction.
    ids = ids_ref[...]                          # (1, TN) int32, lane-dense
    valid = ids < num_graphs
    contrib_src = jnp.where(valid, nodewise, 0.0)                    # (C, TN)
    g_pad = acc_ref.shape[0]
    onehot = (lax.broadcasted_iota(jnp.int32, (g_pad, ids.shape[1]), 0)
              == ids).astype(jnp.float32)                            # (Gp, TN)
    acc_ref[...] += lax.dot_general(onehot, contrib_src, dn,
                                    preferred_element_type=jnp.float32)

    @pl.when(j == pl.num_programs(1) - 1)
    def _():
        graph_ref[...] = acc_ref[...]


def _round_up(x, m):
    return ((x + m - 1) // m) * m


def _default_core_split():
    # Two TensorCores per chip only on v7x-class devices; elsewhere a second
    # shard is just a serialized outer loop (perf review: core_split=1).
    try:
        kind = jax.devices()[0].device_kind.lower()
    except Exception:
        return 1
    return 2 if "v7" in kind else 1


def readout_forward(raw_node_in, raw_node_out, graph_nodes_list, num_graphs,
                    params, *, tile_n=1024, core_split=None):
    """Pallas implementation of Readout.forward (has_graph_labels=True)."""
    if core_split is None:
        core_split = _default_core_split()

    N, H = raw_node_in.shape
    C = params["w_gate"].shape[0]

    # Node tile is the lane axis of the (C, n) output and the sublane axis of
    # the (n, H) inputs -> keep it a multiple of 128; shrink for tiny inputs.
    tile_n = _round_up(min(tile_n, _round_up(N, 128)), 128)
    tiles_total = -(-N // tile_n)
    core_split = max(1, min(core_split, tiles_total))
    tiles_per_shard = -(-tiles_total // core_split)
    n_cov = core_split * tiles_per_shard * tile_n       # grid coverage >= N
    g_pad = max(_round_up(num_graphs, 8), 8)

    # Only the tiny id row is padded (sentinel id -> masked in-kernel); the
    # f32 node features are passed straight through: no pad/cast HBM pass.
    ids_row = jnp.pad(graph_nodes_list.astype(jnp.int32), (0, n_cov - N),
                      constant_values=num_graphs).reshape(1, n_cov)

    # Gate weight split by input half; the nout-facing gate half and the
    # transform weight are fused into a single (2C, H) matmul LHS.
    w_gate = params["w_gate"].astype(jnp.float32)          # (C, 2H)
    w_trans = params["w_trans"].astype(jnp.float32)        # (C, H)
    w_in = w_gate[:, :H]                                   # (C, H)
    w_out = jnp.concatenate([w_gate[:, H:], w_trans], 0)   # (2C, H)
    bg = params["b_gate"].reshape(C, 1).astype(jnp.float32)
    bt = params["b_trans"].reshape(C, 1).astype(jnp.float32)

    tps = tiles_per_shard
    last_blk = tiles_total - 1

    def node_map(c, j):
        # Clamp so a trailing shard tile never DMAs past the unpadded feature
        # arrays; its columns carry sentinel ids and are masked in-kernel.
        return (jnp.minimum(c * tps + j, last_blk), 0)

    ids_map = lambda c, j: (0, c * tps + j)
    const_map = lambda c, j: (0, 0)
    nodewise_map = lambda c, j: (0, c * tps + j)
    graph_map = lambda c, j: (c, 0, 0)

    out_shapes = (
        jax.ShapeDtypeStruct((C, n_cov), jnp.float32),              # nodewise^T
        jax.ShapeDtypeStruct((core_split, g_pad, C), jnp.float32),  # partials
    )

    nodewise_t, graph_partials = pl.pallas_call(
        functools.partial(readout_kernel, num_graphs=num_graphs),
        out_shape=out_shapes,
        grid_spec=pltpu.PrefetchScalarGridSpec(
            num_scalar_prefetch=0,
            grid=(core_split, tiles_per_shard),
            in_specs=[
                pl.BlockSpec((1, tile_n), ids_map),     # graph ids (lane-dense)
                pl.BlockSpec((tile_n, H), node_map),    # raw_node_in  (f32)
                pl.BlockSpec((tile_n, H), node_map),    # raw_node_out (f32)
                pl.BlockSpec((C, H), const_map),        # gate W, nin half
                pl.BlockSpec((2 * C, H), const_map),    # [gate W nout half; transform W]
                pl.BlockSpec((C, 1), const_map),        # gate bias (column)
                pl.BlockSpec((C, 1), const_map),        # transform bias (column)
            ],
            out_specs=(
                pl.BlockSpec((C, tile_n), nodewise_map),
                pl.BlockSpec((None, g_pad, C), graph_map),
            ),
            scratch_shapes=[pltpu.VMEM((g_pad, C), jnp.float32)],
        ),
        # Per-step working set (two (tile_n,H) f32 blocks + (C,tile_n) output,
        # double-buffered) is well under 1 MiB at tile_n=1024 -- far below the
        # default scoped VMEM on v5e/v6e/v7x, so vmem_limit_bytes stays default.
        compiler_params=pltpu.CompilerParams(
            dimension_semantics=("parallel", "arbitrary")),
    )(ids_row, raw_node_in, raw_node_out, w_in, w_out, bg, bt)

    nodewise = nodewise_t[:, :N].T                        # back to (N, C)
    if core_split == 1:
        graph_readout = graph_partials[0, :num_graphs]
    else:
        graph_readout = jnp.sum(graph_partials, axis=0)[:num_graphs]
    return nodewise, graph_readout


def xavier_uniform(key, out_features, in_features):
    # matches nn.init.xavier_uniform_ on a (out, in) weight
    bound = float(np.sqrt(6.0 / (in_features + out_features)))
    return jax.random.uniform(key, (out_features, in_features),
                              jnp.float32, -bound, bound)


def make_params(key, hidden_size, num_classes):
    # TODO(synk): output_dropout (weight dropout in LinearNet) is a no-op here
    # (inference / dropout=0.0).
    k_gate, k_trans = jax.random.split(key)
    return {
        "w_gate": xavier_uniform(k_gate, num_classes, 2 * hidden_size),  # (C, 2H)
        "b_gate": jnp.zeros((num_classes,), jnp.float32),
        "w_trans": xavier_uniform(k_trans, num_classes, hidden_size),    # (C, H)
        "b_trans": jnp.zeros((num_classes,), jnp.float32),
    }


def reference_forward(raw_node_in, raw_node_out, graph_nodes_list, num_graphs,
                      params):
    hp = lax.Precision.HIGHEST     # both sides are full-precision f32
    gate_input = jnp.concatenate([raw_node_in, raw_node_out], axis=-1)
    gating = jax.nn.sigmoid(
        jnp.dot(gate_input, params["w_gate"].T, precision=hp) + params["b_gate"])
    nodewise = gating * (
        jnp.dot(raw_node_out, params["w_trans"].T, precision=hp)
        + params["b_trans"])
    graph_readout = jax.ops.segment_sum(nodewise, graph_nodes_list,
                                        num_segments=num_graphs)
    return nodewise, graph_readout


if __name__ == "__main__":
    # config: hidden_size=32, num_classes=8, has_graph_labels=True.
    # N deliberately not a multiple of the tile to exercise the mask path.
    N, H, C, G = 2500, 32, 8, 5

    key = jax.random.PRNGKey(0)
    k_params, k_in, k_out, k_ids = jax.random.split(key, 4)

    params = make_params(k_params, hidden_size=H, num_classes=C)
    raw_node_in = jax.random.normal(k_in, (N, H), jnp.float32)
    raw_node_out = jax.random.normal(k_out, (N, H), jnp.float32)
    graph_nodes_list = jax.random.randint(k_ids, (N,), 0, G, jnp.int32)

    ref_nodewise, ref_graph = reference_forward(
        raw_node_in, raw_node_out, graph_nodes_list, G, params)

    # 1) default config (core_split auto: 1 on v5e/v6e, 2 on v7x).
    nodewise, graph_readout = readout_forward(
        raw_node_in, raw_node_out, graph_nodes_list, G, params, tile_n=1024)
    jax.block_until_ready((nodewise, graph_readout))
    np.testing.assert_allclose(np.asarray(nodewise), np.asarray(ref_nodewise),
                               rtol=1e-4, atol=5e-4)
    np.testing.assert_allclose(np.asarray(graph_readout), np.asarray(ref_graph),
                               rtol=5e-4, atol=2e-3)

    # 2) force the two-shard (v7x-style) path incl. the clamped trailing tile.
    nodewise2, graph_readout2 = readout_forward(
        raw_node_in, raw_node_out, graph_nodes_list, G, params,
        tile_n=1024, core_split=2)
    jax.block_until_ready((nodewise2, graph_readout2))
    np.testing.assert_allclose(np.asarray(nodewise2), np.asarray(ref_nodewise),
                               rtol=1e-4, atol=5e-4)
    np.testing.assert_allclose(np.asarray(graph_readout2), np.asarray(ref_graph),
                               rtol=5e-4, atol=2e-3)

    print("KERNEL_OK")
</pallas_src>

<mosaic_0001>
module attributes {stable_mosaic.version = 11 : i64} {
  func.func @readout_kernel(%arg0: i32, %arg1: i32, %arg2: memref<1x1024xi32, #tpu.memory_space<vmem>>, %arg3: memref<1024x32xf32, #tpu.memory_space<vmem>>, %arg4: memref<1024x32xf32, #tpu.memory_space<vmem>>, %arg5: memref<8x32xf32, #tpu.memory_space<vmem>>, %arg6: memref<16x32xf32, #tpu.memory_space<vmem>>, %arg7: memref<8x1xf32, #tpu.memory_space<vmem>>, %arg8: memref<8x1xf32, #tpu.memory_space<vmem>>, %arg9: memref<8x1024xf32, #tpu.memory_space<vmem>>, %arg10: memref<1x8x8xf32, #tpu.memory_space<vmem>>, %arg11: memref<8x8xf32, #tpu.memory_space<vmem>>) attributes {dimension_semantics = [#tpu.dimension_semantics<parallel>, #tpu.dimension_semantics<arbitrary>], iteration_bounds = array<i64: 1, 3>, scalar_prefetch = 0 : i64, scratch_operands = 1 : i64, tpu.core_type = #tpu.core_type<tc>, window_params = [{transform_indices = @transform_0, window_bounds = array<i64: 1, 1024>}, {transform_indices = @transform_1, window_bounds = array<i64: 1024, 32>}, {transform_indices = @transform_2, window_bounds = array<i64: 1024, 32>}, {pipeline_mode = #tpu.pipeline_mode<synchronous>, transform_indices = @transform_3, window_bounds = array<i64: 8, 32>}, {pipeline_mode = #tpu.pipeline_mode<synchronous>, transform_indices = @transform_4, window_bounds = array<i64: 16, 32>}, {pipeline_mode = #tpu.pipeline_mode<synchronous>, transform_indices = @transform_5, window_bounds = array<i64: 8, 1>}, {pipeline_mode = #tpu.pipeline_mode<synchronous>, transform_indices = @transform_6, window_bounds = array<i64: 8, 1>}, {transform_indices = @transform_7, window_bounds = array<i64: 8, 1024>}, {transform_indices = @transform_8, window_bounds = array<i64: 1, 8, 8>}]} {
    %c0_i32 = arith.constant 0 : i32
    %0 = arith.cmpi eq, %arg1, %c0_i32 : i32
    %1 = arith.extui %0 : i1 to i32
    %c0_i32_0 = arith.constant 0 : i32
    %2 = arith.cmpi ne, %1, %c0_i32_0 : i32
    scf.if %2 {
      %cst_25 = arith.constant 0.000000e+00 : f32
      %44 = vector.broadcast %cst_25 : f32 to vector<8x8xf32>
      %c0_26 = arith.constant 0 : index
      %c0_27 = arith.constant 0 : index
      %45 = vector.load %arg11[%c0_26, %c0_27] : memref<8x8xf32, #tpu.memory_space<vmem>>, vector<8x8xf32>
      tpu.vector_store %arg11[%c0_26, %c0_27], %44 {strides = array<i32>} : memref<8x8xf32, #tpu.memory_space<vmem>>, vector<8x8xf32>,
    } else {
    }
    %c0 = arith.constant 0 : index
    %c0_1 = arith.constant 0 : index
    %3 = vector.load %arg3[%c0, %c0_1] : memref<1024x32xf32, #tpu.memory_space<vmem>>, vector<1024x32xf32>
    %c0_2 = arith.constant 0 : index
    %c0_3 = arith.constant 0 : index
    %4 = vector.load %arg4[%c0_2, %c0_3] : memref<1024x32xf32, #tpu.memory_space<vmem>>, vector<1024x32xf32>
    %c0_4 = arith.constant 0 : index
    %c0_5 = arith.constant 0 : index
    %5 = vector.load %arg5[%c0_4, %c0_5] : memref<8x32xf32, #tpu.memory_space<vmem>>, vector<8x32xf32>
    %cst = arith.constant dense<0.000000e+00> : vector<8x1024xf32>
    %6 = tpu.matmul %5, %3, %cst {dimension_numbers = #tpu.dot_dimension_numbers<[1], [1], [0], [0], [0, 0, 1, 0], [], []>} : vector<8x32xf32>, vector<1024x32xf32>, vector<8x1024xf32> -> vector<8x1024xf32>
    %c0_6 = arith.constant 0 : index
    %c0_7 = arith.constant 0 : index
    %7 = vector.load %arg6[%c0_6, %c0_7] : memref<16x32xf32, #tpu.memory_space<vmem>>, vector<16x32xf32>
    %cst_8 = arith.constant dense<0.000000e+00> : vector<16x1024xf32>
    %8 = tpu.matmul %7, %4, %cst_8 {dimension_numbers = #tpu.dot_dimension_numbers<[1], [1], [0], [0], [0, 0, 1, 0], [], []>} : vector<16x32xf32>, vector<1024x32xf32>, vector<16x1024xf32> -> vector<16x1024xf32>
    %9 = vector.extract_strided_slice %8 {offsets = [0, 0], sizes = [8, 1024], strides = [1, 1]} : vector<16x1024xf32> to vector<8x1024xf32>
    %10 = arith.addf %6, %9 : vector<8x1024xf32>
    %c0_9 = arith.constant 0 : index
    %c0_10 = arith.constant 0 : index
    %11 = vector.load %arg7[%c0_9, %c0_10] : memref<8x1xf32, #tpu.memory_space<vmem>>, vector<8x1xf32>
    %12 = vector.broadcast %11 : vector<8x1xf32> to vector<8x1024xf32>
    %13 = arith.addf %10, %12 : vector<8x1024xf32>
    %14 = arith.negf %13 : vector<8x1024xf32>
    %15 = math.exp %14 : vector<8x1024xf32>
    %cst_11 = arith.constant 1.000000e+00 : f32
    %16 = vector.broadcast %cst_11 : f32 to vector<8x1024xf32>
    %17 = arith.addf %16, %15 : vector<8x1024xf32>
    %18 = arith.divf %16, %17 : vector<8x1024xf32>
    %19 = vector.extract_strided_slice %8 {offsets = [8, 0], sizes = [8, 1024], strides = [1, 1]} : vector<16x1024xf32> to vector<8x1024xf32>
    %c0_12 = arith.constant 0 : index
    %c0_13 = arith.constant 0 : index
    %20 = vector.load %arg8[%c0_12, %c0_13] : memref<8x1xf32, #tpu.memory_space<vmem>>, vector<8x1xf32>
    %21 = vector.broadcast %20 : vector<8x1xf32> to vector<8x1024xf32>
    %22 = arith.addf %19, %21 : vector<8x1024xf32>
    %23 = arith.mulf %18, %22 : vector<8x1024xf32>
    %c0_14 = arith.constant 0 : index
    %c0_15 = arith.constant 0 : index
    %24 = vector.load %arg9[%c0_14, %c0_15] : memref<8x1024xf32, #tpu.memory_space<vmem>>, vector<8x1024xf32>
    tpu.vector_store %arg9[%c0_14, %c0_15], %23 {strides = array<i32>} : memref<8x1024xf32, #tpu.memory_space<vmem>>, vector<8x1024xf32>,
    %c0_16 = arith.constant 0 : index
    %c0_17 = arith.constant 0 : index
    %25 = vector.load %arg2[%c0_16, %c0_17] : memref<1x1024xi32, #tpu.memory_space<vmem>>, vector<1x1024xi32>
    %c5_i32 = arith.constant 5 : i32
    %26 = vector.broadcast %c5_i32 : i32 to vector<1x1024xi32>
    %27 = arith.cmpi slt, %25, %26 : vector<1x1024xi32>
    %cst_18 = arith.constant 0.000000e+00 : f32
    %28 = vector.shape_cast %27 : vector<1x1024xi1> to vector<1x1024xi1>
    %29 = vector.broadcast %28 : vector<1x1024xi1> to vector<8x1024xi1>
    %30 = vector.broadcast %cst_18 : f32 to vector<8x1024xf32>
    %31 = arith.select %29, %23, %30 : vector<8x1024xi1>, vector<8x1024xf32>
    %32 = tpu.iota {dimensions = array<i32: 0>} : vector<8x1024xi32>
    %33 = vector.broadcast %25 : vector<1x1024xi32> to vector<8x1024xi32>
    %34 = arith.cmpi eq, %32, %33 : vector<8x1024xi32>
    %35 = arith.extui %34 : vector<8x1024xi1> to vector<8x1024xi32>
    %36 = arith.sitofp %35 : vector<8x1024xi32> to vector<8x1024xf32>
    %c0_19 = arith.constant 0 : index
    %c0_20 = arith.constant 0 : index
    %37 = vector.load %arg11[%c0_19, %c0_20] : memref<8x8xf32, #tpu.memory_space<vmem>>, vector<8x8xf32>
    %cst_21 = arith.constant dense<0.000000e+00> : vector<8x8xf32>
    %38 = tpu.matmul %36, %31, %cst_21 {dimension_numbers = #tpu.dot_dimension_numbers<[1], [1], [0], [0], [0, 0, 1, 0], [], []>} : vector<8x1024xf32>, vector<8x1024xf32>, vector<8x8xf32> -> vector<8x8xf32>
    %39 = arith.addf %37, %38 : vector<8x8xf32>
    %c0_22 = arith.constant 0 : index
    %c0_23 = arith.constant 0 : index
    %40 = vector.load %arg11[%c0_22, %c0_23] : memref<8x8xf32, #tpu.memory_space<vmem>>, vector<8x8xf32>
    tpu.vector_store %arg11[%c0_22, %c0_23], %39 {strides = array<i32>} : memref<8x8xf32, #tpu.memory_space<vmem>>, vector<8x8xf32>,
    %c2_i32 = arith.constant 2 : i32
    %41 = arith.cmpi eq, %arg1, %c2_i32 : i32
    %42 = arith.extui %41 : i1 to i32
    %c0_i32_24 = arith.constant 0 : i32
    %43 = arith.cmpi ne, %42, %c0_i32_24 : i32
    scf.if %43 {
      %c0_25 = arith.constant 0 : index
      %c0_26 = arith.constant 0 : index
      %44 = vector.load %arg11[%c0_25, %c0_26] : memref<8x8xf32, #tpu.memory_space<vmem>>, vector<8x8xf32>
      %c0_27 = arith.constant 0 : index
      %c0_28 = arith.constant 0 : index
      %c0_29 = arith.constant 0 : index
      %45 = vector.load %arg10[%c0_27, %c0_28, %c0_29] : memref<1x8x8xf32, #tpu.memory_space<vmem>>, vector<1x8x8xf32>
      %46 = vector.shape_cast %45 : vector<1x8x8xf32> to vector<8x8xf32>
      %47 = vector.shape_cast %44 : vector<8x8xf32> to vector<1x8x8xf32>
      tpu.vector_store %arg10[%c0_27, %c0_28, %c0_29], %47 {strides = array<i32>} : memref<1x8x8xf32, #tpu.memory_space<vmem>>, vector<1x8x8xf32>,
    } else {
    }
    return
  }
  func.func @transform_0(%arg0: i32, %arg1: i32) -> (i32, i32) {
    %c3_i32 = arith.constant 3 : i32
    %0 = arith.muli %arg0, %c3_i32 : i32
    %1 = arith.addi %0, %arg1 : i32
    %c0_i32 = arith.constant 0 : i32
    %c0_i32_0 = arith.constant 0 : i32
    return %c0_i32, %1 : i32, i32
  }
  func.func @transform_1(%arg0: i32, %arg1: i32) -> (i32, i32) {
    %c3_i32 = arith.constant 3 : i32
    %0 = arith.muli %arg0, %c3_i32 : i32
    %1 = arith.addi %0, %arg1 : i32
    %c2_i32 = arith.constant 2 : i32
    %2 = arith.minsi %1, %c2_i32 : i32
    %c0_i32 = arith.constant 0 : i32
    %c0_i32_0 = arith.constant 0 : i32
    return %2, %c0_i32 : i32, i32
  }
  func.func @transform_2(%arg0: i32, %arg1: i32) -> (i32, i32) {
    %c3_i32 = arith.constant 3 : i32
    %0 = arith.muli %arg0, %c3_i32 : i32
    %1 = arith.addi %0, %arg1 : i32
    %c2_i32 = arith.constant 2 : i32
    %2 = arith.minsi %1, %c2_i32 : i32
    %c0_i32 = arith.constant 0 : i32
    %c0_i32_0 = arith.constant 0 : i32
    return %2, %c0_i32 : i32, i32
  }
  func.func @transform_3(%arg0: i32, %arg1: i32) -> (i32, i32) {
    %c0_i32 = arith.constant 0 : i32
    %c0_i32_0 = arith.constant 0 : i32
    %c0_i32_1 = arith.constant 0 : i32
    return %c0_i32, %c0_i32_0 : i32, i32
  }
  func.func @transform_4(%arg0: i32, %arg1: i32) -> (i32, i32) {
    %c0_i32 = arith.constant 0 : i32
    %c0_i32_0 = arith.constant 0 : i32
    %c0_i32_1 = arith.constant 0 : i32
    return %c0_i32, %c0_i32_0 : i32, i32
  }
  func.func @transform_5(%arg0: i32, %arg1: i32) -> (i32, i32) {
    %c0_i32 = arith.constant 0 : i32
    %c0_i32_0 = arith.constant 0 : i32
    %c0_i32_1 = arith.constant 0 : i32
    return %c0_i32, %c0_i32_0 : i32, i32
  }
  func.func @transform_6(%arg0: i32, %arg1: i32) -> (i32, i32) {
    %c0_i32 = arith.constant 0 : i32
    %c0_i32_0 = arith.constant 0 : i32
    %c0_i32_1 = arith.constant 0 : i32
    return %c0_i32, %c0_i32_0 : i32, i32
  }
  func.func @transform_7(%arg0: i32, %arg1: i32) -> (i32, i32) {
    %c3_i32 = arith.constant 3 : i32
    %0 = arith.muli %arg0, %c3_i32 : i32
    %1 = arith.addi %0, %arg1 : i32
    %c0_i32 = arith.constant 0 : i32
    %c0_i32_0 = arith.constant 0 : i32
    return %c0_i32, %1 : i32, i32
  }
  func.func @transform_8(%arg0: i32, %arg1: i32) -> (i32, i32, i32) {
    %c0_i32 = arith.constant 0 : i32
    %c0_i32_0 = arith.constant 0 : i32
    %c0_i32_1 = arith.constant 0 : i32
    return %arg0, %c0_i32, %c0_i32_0 : i32, i32, i32
  }
}

</mosaic_0001>

<llo_original>
// kernel: tpu_custom_call.1
$region0: #{tpu_custom_call.1}
  #allocation0 [shape = 'u32[]', space=smem, size = 0x4, offset = 0x4, fixed_abs, tag = 'smem constant byte address 0x4 - core index']
  #allocation1 [shape = 'u32[144,128]{1,0:T(1,128)}', space=vmem, size = 0x12000, scoped, tag = 'internal scratch']
  #allocation2 [shape = 'f32[8,8]{1,0:T(8,128)}', space=vmem, size = 0x1000, scoped, tag = 'scratch operand']
  %s0 = inlined_call_operand.vmem [shape: s32[1,3072], index: 0, kind: input, shape index: {}]
  %s1 = inlined_call_operand.vmem [shape: f32[2500,32], index: 1, kind: input, shape index: {}]
  %s2 = inlined_call_operand.vmem [shape: f32[2500,32], index: 2, kind: input, shape index: {}]
  %s3 = inlined_call_operand.vmem [shape: f32[8,32], index: 3, kind: input, shape index: {}]
  %s4 = inlined_call_operand.vmem [shape: f32[16,32], index: 4, kind: input, shape index: {}]
  %s5 = inlined_call_operand.vmem [shape: f32[8,1], index: 5, kind: input, shape index: {}]
  %s6 = inlined_call_operand.vmem [shape: f32[8,1], index: 6, kind: input, shape index: {}]
  %s7 = inlined_call_operand.hbm [shape: f32[8,3072], index: 7, kind: output, shape index: {0}]
  %s8 = inlined_call_operand.hbm [shape: f32[1,8,8], index: 8, kind: output, shape index: {1}]
  %9 = xla_tuple %s7, %s8
  %s10 = sld [smem:[#allocation0]]
  $region77: #{tpu_custom_call.1} parent=0
    _
  %s12 = ssub.s32 1, %s10
  %s13 = scalar_select 0, %s12, %s10
  $region1: #{tpu_custom_call.1} parent=0
    #allocation3 [shape = 'u8[65536]{0}', space=vmem, size = 0x10000, scoped, tag = 'output window, operand 0']
    #allocation4 [shape = 's32[2]{0}', space=sflag, size = 0x8, scoped, tag = 'scoped memory for tpu_custom_call.1']
    #allocation5 [shape = 'u8[4096]{0}', space=vmem, size = 0x1000, scoped, tag = 'output window, operand 1, single buffered']
    #allocation6 [shape = 's32[1]{0}', space=sflag, size = 0x4, scoped, tag = 'scoped memory for tpu_custom_call.1']
    %14 = vsyncpa [#allocation4], 0
    %s15 = scalar_lea.sflag [#allocation4], 1
    %16 = vsyncpa %s15, 0
    %17 = vsyncpa [#allocation6], 0
    loop: start=0, step=1, limit=5
    $region2: #{tpu_custom_call.1} parent=1 // loop_pre_header
      _
    $region3: #{tpu_custom_call.1} parent=1 // loop_header
      %s19 = sphi 0, %s23
      %p20 = scmp.ge.s32.totalorder %s19, 5
      %s26 = sphi 0, %s38
      %s27 = sphi 0, %s34
      %s28 = sphi 0, %s26
      %s29 = sphi 0, %s27
      %s30 = sphi 0, %s28
      %s31 = sphi 0, %s29
      %s45 = sphi 0, %s47
      %s48 = sphi 0, %s45
      %s49 = sphi 0, %s48
      %s65 = sphi 0, %s49
      %s79 = sphi 0, %s81
      %s82 = sphi 0, %s79
      %s83 = sphi 0, %s82
      %s99 = sphi 0, %s83
      %s113 = sphi 0, %s115
      %s116 = sphi 0, %s113
      %s117 = sphi 0, %s116
      %s133 = sphi 0, %s117
      %s137 = sphi 0, %s137
      %s139 = sphi 0, %s137
      %s140 = sphi 0, %s139
      %s154 = sphi 0, %s140
      %s158 = sphi 0, %s158
      %s160 = sphi 0, %s158
      %s161 = sphi 0, %s160
      %s175 = sphi 0, %s161
      %s179 = sphi 0, %s179
      %s181 = sphi 0, %s179
      %s182 = sphi 0, %s181
      %s196 = sphi 0, %s182
      %s200 = sphi 0, %s200
      %s202 = sphi 0, %s200
      %s203 = sphi 0, %s202
      %s217 = sphi 0, %s203
      %s227 = sphi 0, %s229
      %s230 = sphi 0, %s227
      %s231 = sphi 0, %s230
      %s247 = sphi 0, %s231
      %s253 = sphi 0, %s255
      %s256 = sphi 0, %s253
      %s257 = sphi 0, %s256
      %s273 = sphi 0, %s257
    $region4: #{tpu_custom_call.1} parent=1 // loop_header_branch
      %22 = sbr.rel (%p20) target = $region8
    $region5: #{tpu_custom_call.1} parent=1 // loop_body
      %s24 = ssub.s32 %s19, 1
      %s25 = ssub.s32 %s19, 2
      %s32 = sadd.s32 1, %s27
      %p33 = scmp.ge.s32.totalorder %s32, 3
      %s34 = scalar_select %p33, 0, %s32
      %s35 = sadd.s32 1, %s26
      %s36 = scalar_select %p33, %s35, %s26
      %p37 = scmp.ge.s32.totalorder %s36, 1
      %s38 = scalar_select %p37, 0, %s36
      %s39 = smul.u32 %s26, 3
      %s40 = sadd.s32 %s39, %s27
      %s41 = smul.u32 %s38, 3
      %s42 = sadd.s32 %s41, %s34
      %s43 = ssub.s32 %s40, %s42
      %p44 = scmp.eq.s32.totalorder %s43, 0
      %s46 = sadd.s32 %s45, 1
      %s47 = scalar_select %p44, %s45, %s46
      %p50 = pneg %p44
      %p51 = scmp.eq.s32.totalorder %s19, 2
      %p52 = por %p50, %p51
      %p53 = scmp.ne.s32.totalorder %s45, %s48
      %p54 = scmp.eq.s32.totalorder %s19, 0
      %p55 = por %p53, %p54
      %p56 = scmp.ne.s32.totalorder %s45, %s48
      %p57 = scmp.eq.s32.totalorder %s24, 2
      %p58 = por %p56, %p57
      %p59 = scmp.ne.s32.totalorder %s48, %s49
      %p60 = scmp.eq.s32.totalorder %s24, 0
      %p61 = por %p59, %p60
      %p62 = scmp.ne.s32.totalorder %s48, %s49
      %p63 = scmp.eq.s32.totalorder %s25, 2
      %p64 = por %p62, %p63
      %p66 = scmp.ne.s32.totalorder %s49, %s65
      %p67 = scmp.eq.s32.totalorder %s25, 0
      %p68 = por %p66, %p67
      %s69 = smul.u32 %s26, 3
      %s70 = sadd.s32 %s69, %s27
      %p71 = scmp.lt.s32.totalorder %s70, 2
      %s72 = scalar_select %p71, %s70, 2
      %s73 = smul.u32 %s38, 3
      %s74 = sadd.s32 %s73, %s34
      %p75 = scmp.lt.s32.totalorder %s74, 2
      %s76 = scalar_select %p75, %s74, 2
      %s77 = ssub.s32 %s72, %s76
      %p78 = scmp.eq.s32.totalorder %s77, 0
      %s80 = sadd.s32 %s79, 1
      %s81 = scalar_select %p78, %s79, %s80
      %p84 = pneg %p78
      %p85 = scmp.eq.s32.totalorder %s19, 2
      %p86 = por %p84, %p85
      %p87 = scmp.ne.s32.totalorder %s79, %s82
      %p88 = scmp.eq.s32.totalorder %s19, 0
      %p89 = por %p87, %p88
      %p90 = scmp.ne.s32.totalorder %s79, %s82
      %p91 = scmp.eq.s32.totalorder %s24, 2
      %p92 = por %p90, %p91
      %p93 = scmp.ne.s32.totalorder %s82, %s83
      %p94 = scmp.eq.s32.totalorder %s24, 0
      %p95 = por %p93, %p94
      %p96 = scmp.ne.s32.totalorder %s82, %s83
      %p97 = scmp.eq.s32.totalorder %s25, 2
      %p98 = por %p96, %p97
      %p100 = scmp.ne.s32.totalorder %s83, %s99
      %p101 = scmp.eq.s32.totalorder %s25, 0
      %p102 = por %p100, %p101
      %s103 = smul.u32 %s26, 3
      %s104 = sadd.s32 %s103, %s27
      %p105 = scmp.lt.s32.totalorder %s104, 2
      %s106 = scalar_select %p105, %s104, 2
      %s107 = smul.u32 %s38, 3
      %s108 = sadd.s32 %s107, %s34
      %p109 = scmp.lt.s32.totalorder %s108, 2
      %s110 = scalar_select %p109, %s108, 2
      %s111 = ssub.s32 %s106, %s110
      %p112 = scmp.eq.s32.totalorder %s111, 0
      %s114 = sadd.s32 %s113, 1
      %s115 = scalar_select %p112, %s113, %s114
      %p118 = pneg %p112
      %p119 = scmp.eq.s32.totalorder %s19, 2
      %p120 = por %p118, %p119
      %p121 = scmp.ne.s32.totalorder %s113, %s116
      %p122 = scmp.eq.s32.totalorder %s19, 0
      %p123 = por %p121, %p122
      %p124 = scmp.ne.s32.totalorder %s113, %s116
      %p125 = scmp.eq.s32.totalorder %s24, 2
      %p126 = por %p124, %p125
      %p127 = scmp.ne.s32.totalorder %s116, %s117
      %p128 = scmp.eq.s32.totalorder %s24, 0
      %p129 = por %p127, %p128
      %p130 = scmp.ne.s32.totalorder %s116, %s117
      %p131 = scmp.eq.s32.totalorder %s25, 2
      %p132 = por %p130, %p131
      %p134 = scmp.ne.s32.totalorder %s117, %s133
      %p135 = scmp.eq.s32.totalorder %s25, 0
      %p136 = por %p134, %p135
      %s138 = sadd.s32 %s137, 1
      %p141 = scmp.eq.s32.totalorder %s19, 2
      %p142 = scmp.ne.s32.totalorder %s137, %s139
      %p143 = scmp.eq.s32.totalorder %s19, 0
      %p144 = por %p142, %p143
      %p145 = scmp.ne.s32.totalorder %s137, %s139
      %p146 = scmp.eq.s32.totalorder %s24, 2
      %p147 = por %p145, %p146
      %p148 = scmp.ne.s32.totalorder %s139, %s140
      %p149 = scmp.eq.s32.totalorder %s24, 0
      %p150 = por %p148, %p149
      %p151 = scmp.ne.s32.totalorder %s139, %s140
      %p152 = scmp.eq.s32.totalorder %s25, 2
      %p153 = por %p151, %p152
      %p155 = scmp.ne.s32.totalorder %s140, %s154
      %p156 = scmp.eq.s32.totalorder %s25, 0
      %p157 = por %p155, %p156
      %s159 = sadd.s32 %s158, 1
      %p162 = scmp.eq.s32.totalorder %s19, 2
      %p163 = scmp.ne.s32.totalorder %s158, %s160
      %p164 = scmp.eq.s32.totalorder %s19, 0
      %p165 = por %p163, %p164
      %p166 = scmp.ne.s32.totalorder %s158, %s160
      %p167 = scmp.eq.s32.totalorder %s24, 2
      %p168 = por %p166, %p167
      %p169 = scmp.ne.s32.totalorder %s160, %s161
      %p170 = scmp.eq.s32.totalorder %s24, 0
      %p171 = por %p169, %p170
      %p172 = scmp.ne.s32.totalorder %s160, %s161
      %p173 = scmp.eq.s32.totalorder %s25, 2
      %p174 = por %p172, %p173
      %p176 = scmp.ne.s32.totalorder %s161, %s175
      %p177 = scmp.eq.s32.totalorder %s25, 0
      %p178 = por %p176, %p177
      %s180 = sadd.s32 %s179, 1
      %p183 = scmp.eq.s32.totalorder %s19, 2
      %p184 = scmp.ne.s32.totalorder %s179, %s181
      %p185 = scmp.eq.s32.totalorder %s19, 0
      %p186 = por %p184, %p185
      %p187 = scmp.ne.s32.totalorder %s179, %s181
      %p188 = scmp.eq.s32.totalorder %s24, 2
      %p189 = por %p187, %p188
      %p190 = scmp.ne.s32.totalorder %s181, %s182
      %p191 = scmp.eq.s32.totalorder %s24, 0
      %p192 = por %p190, %p191
      %p193 = scmp.ne.s32.totalorder %s181, %s182
      %p194 = scmp.eq.s32.totalorder %s25, 2
      %p195 = por %p193, %p194
      %p197 = scmp.ne.s32.totalorder %s182, %s196
      %p198 = scmp.eq.s32.totalorder %s25, 0
      %p199 = por %p197, %p198
      %s201 = sadd.s32 %s200, 1
      %p204 = scmp.eq.s32.totalorder %s19, 2
      %p205 = scmp.ne.s32.totalorder %s200, %s202
      %p206 = scmp.eq.s32.totalorder %s19, 0
      %p207 = por %p205, %p206
      %p208 = scmp.ne.s32.totalorder %s200, %s202
      %p209 = scmp.eq.s32.totalorder %s24, 2
      %p210 = por %p208, %p209
      %p211 = scmp.ne.s32.totalorder %s202, %s203
      %p212 = scmp.eq.s32.totalorder %s24, 0
      %p213 = por %p211, %p212
      %p214 = scmp.ne.s32.totalorder %s202, %s203
      %p215 = scmp.eq.s32.totalorder %s25, 2
      %p216 = por %p214, %p215
      %p218 = scmp.ne.s32.totalorder %s203, %s217
      %p219 = scmp.eq.s32.totalorder %s25, 0
      %p220 = por %p218, %p219
      %s221 = smul.u32 %s26, 3
      %s222 = sadd.s32 %s221, %s27
      %s223 = smul.u32 %s38, 3
      %s224 = sadd.s32 %s223, %s34
      %s225 = ssub.s32 %s222, %s224
      %p226 = scmp.eq.s32.totalorder %s225, 0
      %s228 = sadd.s32 %s227, 1
      %s229 = scalar_select %p226, %s227, %s228
      %p232 = pneg %p226
      %p233 = scmp.eq.s32.totalorder %s19, 2
      %p234 = por %p232, %p233
      %p235 = scmp.ne.s32.totalorder %s227, %s230
      %p236 = scmp.eq.s32.totalorder %s19, 0
      %p237 = por %p235, %p236
      %p238 = scmp.ne.s32.totalorder %s227, %s230
      %p239 = scmp.eq.s32.totalorder %s24, 2
      %p240 = por %p238, %p239
      %p241 = scmp.ne.s32.totalorder %s230, %s231
      %p242 = scmp.eq.s32.totalorder %s24, 0
      %p243 = por %p241, %p242
      %p244 = scmp.ne.s32.totalorder %s230, %s231
      %p245 = scmp.eq.s32.totalorder %s25, 2
      %p246 = por %p244, %p245
      %p248 = scmp.ne.s32.totalorder %s231, %s247
      %p249 = scmp.eq.s32.totalorder %s25, 0
      %p250 = por %p248, %p249
      %s251 = ssub.s32 %s26, %s38
      %p252 = scmp.eq.s32.totalorder %s251, 0
      %s254 = sadd.s32 %s253, 1
      %s255 = scalar_select %p252, %s253, %s254
      %p258 = pneg %p252
      %p259 = scmp.eq.s32.totalorder %s19, 2
      %p260 = por %p258, %p259
      %p261 = scmp.ne.s32.totalorder %s253, %s256
      %p262 = scmp.eq.s32.totalorder %s19, 0
      %p263 = por %p261, %p262
      %p264 = scmp.ne.s32.totalorder %s253, %s256
      %p265 = scmp.eq.s32.totalorder %s24, 2
      %p266 = por %p264, %p265
      %p267 = scmp.ne.s32.totalorder %s256, %s257
      %p268 = scmp.eq.s32.totalorder %s24, 0
      %p269 = por %p267, %p268
      %p270 = scmp.ne.s32.totalorder %s256, %s257
      %p271 = scmp.eq.s32.totalorder %s25, 2
      %p272 = por %p270, %p271
      %p274 = scmp.ne.s32.totalorder %s257, %s273
      %p275 = scmp.eq.s32.totalorder %s25, 0
      %p276 = por %p274, %p275
      %p277 = scmp.le.s32.totalorder 1, %s19
      %p278 = scmp.lt.s32.totalorder %s19, 4
      %p279 = pnand %p277, %p278
      %p280 = pneg %p279
      // Predicated region
      $region9: #{tpu_custom_call.1} parent=5 // pred_check
        _
      $region10: #{tpu_custom_call.1} parent=5 // pred_check_branch
        %282 = sbr.rel (%p279) target = $region12
      $region11: #{tpu_custom_call.1} parent=5 // pred_region
        %s283 = ssub.s32 %s19, 1
        // Predicated region
        $region13: #{tpu_custom_call.1} parent=11 // pred_check
          %p284 = pneg %p150
        $region14: #{tpu_custom_call.1} parent=11 // pred_check_branch
          %286 = sbr.rel (%p284) target = $region16
        $region15: #{tpu_custom_call.1} parent=11 // pred_region
          _
        $region16: #{tpu_custom_call.1} parent=11 // pred_fallthru
          _
        // Predicated region
        $region17: #{tpu_custom_call.1} parent=11 // pred_check
          %p287 = pneg %p171
        $region18: #{tpu_custom_call.1} parent=11 // pred_check_branch
          %289 = sbr.rel (%p287) target = $region20
        $region19: #{tpu_custom_call.1} parent=11 // pred_region
          _
        $region20: #{tpu_custom_call.1} parent=11 // pred_fallthru
          _
        // Predicated region
        $region21: #{tpu_custom_call.1} parent=11 // pred_check
          %p290 = pneg %p192
        $region22: #{tpu_custom_call.1} parent=11 // pred_check_branch
          %292 = sbr.rel (%p290) target = $region24
        $region23: #{tpu_custom_call.1} parent=11 // pred_region
          _
        $region24: #{tpu_custom_call.1} parent=11 // pred_fallthru
          _
        // Predicated region
        $region25: #{tpu_custom_call.1} parent=11 // pred_check
          %p293 = pneg %p213
        $region26: #{tpu_custom_call.1} parent=11 // pred_check_branch
          %295 = sbr.rel (%p293) target = $region28
        $region27: #{tpu_custom_call.1} parent=11 // pred_region
          _
        $region28: #{tpu_custom_call.1} parent=11 // pred_fallthru
          _
      $region12: #{tpu_custom_call.1} parent=5 // pred_fallthru
        _
      %p296 = scmp.lt.s32.totalorder %s19, 3
      // Predicated region
      $region29: #{tpu_custom_call.1} parent=5 // pred_check
        %p297 = pneg %p296
      $region30: #{tpu_custom_call.1} parent=5 // pred_check_branch
        %299 = sbr.rel (%p297) target = $region32
      $region31: #{tpu_custom_call.1} parent=5 // pred_region
        // Predicated region
        $region33: #{tpu_custom_call.1} parent=31 // pred_check
          %p300 = pneg %p55
        $region34: #{tpu_custom_call.1} parent=31 // pred_check_branch
          %302 = sbr.rel (%p300) target = $region36
        $region35: #{tpu_custom_call.1} parent=31 // pred_region
          %s303 = smul.u32 %s26, 3
          %s304 = sadd.s32 %s303, %s27
          %s305 = smul.u32 8, %s304
          %p306 = scmp.lt.s32.totalorder %s305, 23
          %s307 = scalar_select %p306, %s305, 23
          %s308 = scalar_lea.vmem %s0, %s307
          %s309 = smul.u32 %s26, 3
          %s310 = sadd.s32 %s309, %s27
          %s311 = smul.u32 8, %s310
        $region36: #{tpu_custom_call.1} parent=31 // pred_fallthru
          _
        // Predicated region
        $region37: #{tpu_custom_call.1} parent=31 // pred_check
          %p312 = pneg %p89
        $region38: #{tpu_custom_call.1} parent=31 // pred_check_branch
          %314 = sbr.rel (%p312) target = $region40
        $region39: #{tpu_custom_call.1} parent=31 // pred_region
          %s315 = smul.u32 %s26, 3
          %s316 = sadd.s32 %s315, %s27
          %p317 = scmp.lt.s32.totalorder %s316, 2
          %s318 = scalar_select %p317, %s316, 2
          %s319 = smul.u32 128, %s318
          %s320 = ssub.s32 313, %s319
          %p321 = scmp.lt.s32.totalorder %s320, 128
          %s322 = scalar_select %p321, %s320, 128
          %s323 = smul.u32 128, %s322
          %p324 = scmp.lt.s32.totalorder %s319, 312
          %s325 = scalar_select %p324, %s319, 312
          %s326 = smul.addr %s325, 8
          %s327 = scalar_lea.vmem %s1, %s326
          %s328 = smul.u32 %s26, 3
          %s329 = sadd.s32 %s328, %s27
          %p330 = scmp.lt.s32.totalorder %s329, 2
          %s331 = scalar_select %p330, %s329, 2
          %s332 = smul.u32 128, %s331
          %s333 = ssub.s32 313, %s332
          %p334 = scmp.lt.s32.totalorder %s333, 128
          %s335 = scalar_select %p334, %s333, 128
          %s336 = smul.u32 128, %s335
        $region40: #{tpu_custom_call.1} parent=31 // pred_fallthru
          _
        // Predicated region
        $region41: #{tpu_custom_call.1} parent=31 // pred_check
          %p337 = pneg %p123
        $region42: #{tpu_custom_call.1} parent=31 // pred_check_branch
          %339 = sbr.rel (%p337) target = $region44
        $region43: #{tpu_custom_call.1} parent=31 // pred_region
          %s340 = smul.u32 %s26, 3
          %s341 = sadd.s32 %s340, %s27
          %p342 = scmp.lt.s32.totalorder %s341, 2
          %s343 = scalar_select %p342, %s341, 2
          %s344 = smul.u32 128, %s343
          %s345 = ssub.s32 313, %s344
          %p346 = scmp.lt.s32.totalorder %s345, 128
          %s347 = scalar_select %p346, %s345, 128
          %s348 = smul.u32 128, %s347
          %p349 = scmp.lt.s32.totalorder %s344, 312
          %s350 = scalar_select %p349, %s344, 312
          %s351 = smul.addr %s350, 8
          %s352 = scalar_lea.vmem %s2, %s351
          %s353 = smul.u32 %s26, 3
          %s354 = sadd.s32 %s353, %s27
          %p355 = scmp.lt.s32.totalorder %s354, 2
          %s356 = scalar_select %p355, %s354, 2
          %s357 = smul.u32 128, %s356
          %s358 = ssub.s32 313, %s357
          %p359 = scmp.lt.s32.totalorder %s358, 128
          %s360 = scalar_select %p359, %s358, 128
          %s361 = smul.u32 128, %s360
        $region44: #{tpu_custom_call.1} parent=31 // pred_fallthru
          _
      $region32: #{tpu_custom_call.1} parent=5 // pred_fallthru
        _
      %p362 = scmp.le.s32.totalorder 1, %s19
      %p363 = scmp.lt.s32.totalorder %s19, 4
      %p364 = pnand %p362, %p363
      %p365 = pneg %p364
      // Predicated region
      $region45: #{tpu_custom_call.1} parent=5 // pred_check
        _
      $region46: #{tpu_custom_call.1} parent=5 // pred_check_branch
        %367 = sbr.rel (%p364) target = $region48
      $region47: #{tpu_custom_call.1} parent=5 // pred_region
        %s368 = ssub.s32 %s19, 1
        %s369 = smul.u32 %s28, 3
        %s370 = sadd.s32 %s369, %s29
        %s371 = smul.u32 8, %s370
        %p372 = scmp.lt.s32.totalorder %s371, 23
        %s373 = scalar_select %p372, %s371, 23
        %s374 = scalar_lea.vmem %s0, %s373
        %p375 = pneg %p61
        %p376 = pneg %p58
        %s377 = smul.u32 %s28, 3
        %s378 = sadd.s32 %s377, %s29
        %p379 = scmp.lt.s32.totalorder %s378, 2
        %s380 = scalar_select %p379, %s378, 2
        %s381 = smul.u32 128, %s380
        %s382 = ssub.s32 313, %s381
        %p383 = scmp.lt.s32.totalorder %s382, 128
        %s384 = scalar_select %p383, %s382, 128
        %s385 = smul.u32 128, %s384
        %p386 = scmp.lt.s32.totalorder %s381, 312
        %s387 = scalar_select %p386, %s381, 312
        %s388 = smul.addr %s387, 8
        %s389 = scalar_lea.vmem %s1, %s388
        %p390 = pneg %p95
        %p391 = pneg %p92
        %s392 = smul.u32 %s28, 3
        %s393 = sadd.s32 %s392, %s29
        %p394 = scmp.lt.s32.totalorder %s393, 2
        %s395 = scalar_select %p394, %s393, 2
        %s396 = smul.u32 128, %s395
        %s397 = ssub.s32 313, %s396
        %p398 = scmp.lt.s32.totalorder %s397, 128
        %s399 = scalar_select %p398, %s397, 128
        %s400 = smul.u32 128, %s399
        %p401 = scmp.lt.s32.totalorder %s396, 312
        %s402 = scalar_select %p401, %s396, 312
        %s403 = smul.addr %s402, 8
        %s404 = scalar_lea.vmem %s2, %s403
        %p405 = pneg %p129
        %p406 = pneg %p126
        %p407 = pneg %p150
        %p408 = pneg %p147
        %p409 = pneg %p171
        %p410 = pneg %p168
        %p411 = pneg %p192
        %p412 = pneg %p189
        %p413 = pneg %p213
        %p414 = pneg %p210
        %p415 = pneg %p243
        %p416 = pneg %p240
        %s417 = sand.u32 %s230, 1
        %s418 = scalar_lea.sflag [#allocation4], %s417
        %s419 = sand.u32 %s230, 1
        %s420 = smul.addr %s419, 64
        %s421 = scalar_lea.vmem [#allocation3], %s420
        %p422 = pneg %p269
        %p423 = pneg %p266
        %s424 = smul.u32 %s28, 3
        %s425 = sadd.s32 %s424, %s29
        %s426 = smul.u32 8, %s425
        %p427 = scmp.lt.s32.totalorder %s426, 23
        %s428 = scalar_select %p427, %s426, 23
        %s429 = scalar_lea.vmem %s0, %s428
        %s430 = smul.u32 %s28, 3
        %s431 = sadd.s32 %s430, %s29
        %s432 = smul.u32 8, %s431
        %s433 = smul.u32 %s28, 3
        %s434 = sadd.s32 %s433, %s29
        %p435 = scmp.lt.s32.totalorder %s434, 2
        %s436 = scalar_select %p435, %s434, 2
        %s437 = smul.u32 128, %s436
        %s438 = ssub.s32 313, %s437
        %p439 = scmp.lt.s32.totalorder %s438, 128
        %s440 = scalar_select %p439, %s438, 128
        %s441 = smul.u32 128, %s440
        %p442 = scmp.lt.s32.totalorder %s437, 312
        %s443 = scalar_select %p442, %s437, 312
        %s444 = smul.addr %s443, 8
        %s445 = scalar_lea.vmem %s1, %s444
        %s446 = smul.u32 %s28, 3
        %s447 = sadd.s32 %s446, %s29
        %p448 = scmp.lt.s32.totalorder %s447, 2
        %s449 = scalar_select %p448, %s447, 2
        %s450 = smul.u32 128, %s449
        %s451 = ssub.s32 313, %s450
        %p452 = scmp.lt.s32.totalorder %s451, 128
        %s453 = scalar_select %p452, %s451, 128
        %s454 = smul.u32 128, %s453
        %s455 = smul.u32 %s28, 3
        %s456 = sadd.s32 %s455, %s29
        %p457 = scmp.lt.s32.totalorder %s456, 2
        %s458 = scalar_select %p457, %s456, 2
        %s459 = smul.u32 128, %s458
        %s460 = ssub.s32 313, %s459
        %p461 = scmp.lt.s32.totalorder %s460, 128
        %s462 = scalar_select %p461, %s460, 128
        %s463 = smul.u32 128, %s462
        %p464 = scmp.lt.s32.totalorder %s459, 312
        %s465 = scalar_select %p464, %s459, 312
        %s466 = smul.addr %s465, 8
        %s467 = scalar_lea.vmem %s2, %s466
        %s468 = smul.u32 %s28, 3
        %s469 = sadd.s32 %s468, %s29
        %p470 = scmp.lt.s32.totalorder %s469, 2
        %s471 = scalar_select %p470, %s469, 2
        %s472 = smul.u32 128, %s471
        %s473 = ssub.s32 313, %s472
        %p474 = scmp.lt.s32.totalorder %s473, 128
        %s475 = scalar_select %p474, %s473, 128
        %s476 = smul.u32 128, %s475
        %s477 = smul.u32 %s28, 3
        %s478 = sadd.s32 %s477, %s29
        %s479 = smul.u32 8, %s478
        %p480 = scmp.eq.s32.totalorder %s29, 0
        // Predicated region
        $region49: #{tpu_custom_call.1} parent=47 // pred_check
          %p481 = pneg %p480
        $region50: #{tpu_custom_call.1} parent=47 // pred_check_branch
          %483 = sbr.rel (%p481) target = $region52
        $region51: #{tpu_custom_call.1} parent=47 // pred_region
          %vm484 = vcmask 64512
          %485 = vst.msk [vmem:[#allocation2] sm:$0xff] %vm484, 0.0
        $region52: #{tpu_custom_call.1} parent=47 // pred_fallthru
          _
        %v486 = vld [vmem:[%s445] sm:$0xff]
        %v487 = vld [vmem:[%s445 + $0x8] sm:$0xff]
        %v488 = vld [vmem:[%s445 + $0x10] sm:$0xff]
        %v489 = vld [vmem:[%s445 + $0x18] sm:$0xff]
        %v490 = vld [vmem:[%s445 + $0x20] sm:$0xff]
        %v491 = vld [vmem:[%s445 + $0x28] sm:$0xff]
        %v492 = vld [vmem:[%s445 + $0x30] sm:$0xff]
        %v493 = vld [vmem:[%s445 + $0x38] sm:$0xff]
        %v494 = vld [vmem:[%s445 + $0x40] sm:$0xff]
        %v495 = vld [vmem:[%s445 + $0x48] sm:$0xff]
        %v496 = vld [vmem:[%s445 + $0x50] sm:$0xff]
        %v497 = vld [vmem:[%s445 + $0x58] sm:$0xff]
        %v498 = vld [vmem:[%s445 + $0x60] sm:$0xff]
        %v499 = vld [vmem:[%s445 + $0x68] sm:$0xff]
        %v500 = vld [vmem:[%s445 + $0x70] sm:$0xff]
        %v501 = vld [vmem:[%s445 + $0x78] sm:$0xff]
        %v502 = vld [vmem:[%s445 + $0x80] sm:$0xff]
        %v503 = vld [vmem:[%s445 + $0x88] sm:$0xff]
        %v504 = vld [vmem:[%s445 + $0x90] sm:$0xff]
        %v505 = vld [vmem:[%s445 + $0x98] sm:$0xff]
        %v506 = vld [vmem:[%s445 + $0xa0] sm:$0xff]
        %v507 = vld [vmem:[%s445 + $0xa8] sm:$0xff]
        %v508 = vld [vmem:[%s445 + $0xb0] sm:$0xff]
        %v509 = vld [vmem:[%s445 + $0xb8] sm:$0xff]
        %v510 = vld [vmem:[%s445 + $0xc0] sm:$0xff]
        %v511 = vld [vmem:[%s445 + $0xc8] sm:$0xff]
        %v512 = vld [vmem:[%s445 + $0xd0] sm:$0xff]
        %v513 = vld [vmem:[%s445 + $0xd8] sm:$0xff]
        %v514 = vld [vmem:[%s445 + $0xe0] sm:$0xff]
        %v515 = vld [vmem:[%s445 + $0xe8] sm:$0xff]
        %v516 = vld [vmem:[%s445 + $0xf0] sm:$0xff]
        %v517 = vld [vmem:[%s445 + $0xf8] sm:$0xff]
        %v518 = vld [vmem:[%s445 + $0x100] sm:$0xff]
        %v519 = vld [vmem:[%s445 + $0x108] sm:$0xff]
        %v520 = vld [vmem:[%s445 + $0x110] sm:$0xff]
        %v521 = vld [vmem:[%s445 + $0x118] sm:$0xff]
        %v522 = vld [vmem:[%s445 + $0x120] sm:$0xff]
        %v523 = vld [vmem:[%s445 + $0x128] sm:$0xff]
        %v524 = vld [vmem:[%s445 + $0x130] sm:$0xff]
        %v525 = vld [vmem:[%s445 + $0x138] sm:$0xff]
        %v526 = vld [vmem:[%s445 + $0x140] sm:$0xff]
        %v527 = vld [vmem:[%s445 + $0x148] sm:$0xff]
        %v528 = vld [vmem:[%s445 + $0x150] sm:$0xff]
        %v529 = vld [vmem:[%s445 + $0x158] sm:$0xff]
        %v530 = vld [vmem:[%s445 + $0x160] sm:$0xff]
        %v531 = vld [vmem:[%s445 + $0x168] sm:$0xff]
        %v532 = vld [vmem:[%s445 + $0x170] sm:$0xff]
        %v533 = vld [vmem:[%s445 + $0x178] sm:$0xff]
        %v534 = vld [vmem:[%s445 + $0x180] sm:$0xff]
        %v535 = vld [vmem:[%s445 + $0x188] sm:$0xff]
        %v536 = vld [vmem:[%s445 + $0x190] sm:$0xff]
        %v537 = vld [vmem:[%s445 + $0x198] sm:$0xff]
        %v538 = vld [vmem:[%s445 + $0x1a0] sm:$0xff]
        %v539 = vld [vmem:[%s445 + $0x1a8] sm:$0xff]
        %v540 = vld [vmem:[%s445 + $0x1b0] sm:$0xff]
        %v541 = vld [vmem:[%s445 + $0x1b8] sm:$0xff]
        %v542 = vld [vmem:[%s445 + $0x1c0] sm:$0xff]
        %v543 = vld [vmem:[%s445 + $0x1c8] sm:$0xff]
        %v544 = vld [vmem:[%s445 + $0x1d0] sm:$0xff]
        %v545 = vld [vmem:[%s445 + $0x1d8] sm:$0xff]
        %v546 = vld [vmem:[%s445 + $0x1e0] sm:$0xff]
        %v547 = vld [vmem:[%s445 + $0x1e8] sm:$0xff]
        %v548 = vld [vmem:[%s445 + $0x1f0] sm:$0xff]
        %v549 = vld [vmem:[%s445 + $0x1f8] sm:$0xff]
        %v550 = vld [vmem:[%s445 + $0x200] sm:$0xff]
        %v551 = vld [vmem:[%s445 + $0x208] sm:$0xff]
        %v552 = vld [vmem:[%s445 + $0x210] sm:$0xff]
        %v553 = vld [vmem:[%s445 + $0x218] sm:$0xff]
        %v554 = vld [vmem:[%s445 + $0x220] sm:$0xff]
        %v555 = vld [vmem:[%s445 + $0x228] sm:$0xff]
        %v556 = vld [vmem:[%s445 + $0x230] sm:$0xff]
        %v557 = vld [vmem:[%s445 + $0x238] sm:$0xff]
        %v558 = vld [vmem:[%s445 + $0x240] sm:$0xff]
        %v559 = vld [vmem:[%s445 + $0x248] sm:$0xff]
        %v560 = vld [vmem:[%s445 + $0x250] sm:$0xff]
        %v561 = vld [vmem:[%s445 + $0x258] sm:$0xff]
        %v562 = vld [vmem:[%s445 + $0x260] sm:$0xff]
        %v563 = vld [vmem:[%s445 + $0x268] sm:$0xff]
        %v564 = vld [vmem:[%s445 + $0x270] sm:$0xff]
        %v565 = vld [vmem:[%s445 + $0x278] sm:$0xff]
        %v566 = vld [vmem:[%s445 + $0x280] sm:$0xff]
        %v567 = vld [vmem:[%s445 + $0x288] sm:$0xff]
        %v568 = vld [vmem:[%s445 + $0x290] sm:$0xff]
        %v569 = vld [vmem:[%s445 + $0x298] sm:$0xff]
        %v570 = vld [vmem:[%s445 + $0x2a0] sm:$0xff]
        %v571 = vld [vmem:[%s445 + $0x2a8] sm:$0xff]
        %v572 = vld [vmem:[%s445 + $0x2b0] sm:$0xff]
        %v573 = vld [vmem:[%s445 + $0x2b8] sm:$0xff]
        %v574 = vld [vmem:[%s445 + $0x2c0] sm:$0xff]
        %v575 = vld [vmem:[%s445 + $0x2c8] sm:$0xff]
        %v576 = vld [vmem:[%s445 + $0x2d0] sm:$0xff]
        %v577 = vld [vmem:[%s445 + $0x2d8] sm:$0xff]
        %v578 = vld [vmem:[%s445 + $0x2e0] sm:$0xff]
        %v579 = vld [vmem:[%s445 + $0x2e8] sm:$0xff]
        %v580 = vld [vmem:[%s445 + $0x2f0] sm:$0xff]
        %v581 = vld [vmem:[%s445 + $0x2f8] sm:$0xff]
        %v582 = vld [vmem:[%s445 + $0x300] sm:$0xff]
        %v583 = vld [vmem:[%s445 + $0x308] sm:$0xff]
        %v584 = vld [vmem:[%s445 + $0x310] sm:$0xff]
        %v585 = vld [vmem:[%s445 + $0x318] sm:$0xff]
        %v586 = vld [vmem:[%s445 + $0x320] sm:$0xff]
        %v587 = vld [vmem:[%s445 + $0x328] sm:$0xff]
        %v588 = vld [vmem:[%s445 + $0x330] sm:$0xff]
        %v589 = vld [vmem:[%s445 + $0x338] sm:$0xff]
        %v590 = vld [vmem:[%s445 + $0x340] sm:$0xff]
        %v591 = vld [vmem:[%s445 + $0x348] sm:$0xff]
        %v592 = vld [vmem:[%s445 + $0x350] sm:$0xff]
        %v593 = vld [vmem:[%s445 + $0x358] sm:$0xff]
        %v594 = vld [vmem:[%s445 + $0x360] sm:$0xff]
        %v595 = vld [vmem:[%s445 + $0x368] sm:$0xff]
        %v596 = vld [vmem:[%s445 + $0x370] sm:$0xff]
        %v597 = vld [vmem:[%s445 + $0x378] sm:$0xff]
        %v598 = vld [vmem:[%s445 + $0x380] sm:$0xff]
        %v599 = vld [vmem:[%s445 + $0x388] sm:$0xff]
        %v600 = vld [vmem:[%s445 + $0x390] sm:$0xff]
        %v601 = vld [vmem:[%s445 + $0x398] sm:$0xff]
        %v602 = vld [vmem:[%s445 + $0x3a0] sm:$0xff]
        %v603 = vld [vmem:[%s445 + $0x3a8] sm:$0xff]
        %v604 = vld [vmem:[%s445 + $0x3b0] sm:$0xff]
        %v605 = vld [vmem:[%s445 + $0x3b8] sm:$0xff]
        %v606 = vld [vmem:[%s445 + $0x3c0] sm:$0xff]
        %v607 = vld [vmem:[%s445 + $0x3c8] sm:$0xff]
        %v608 = vld [vmem:[%s445 + $0x3d0] sm:$0xff]
        %v609 = vld [vmem:[%s445 + $0x3d8] sm:$0xff]
        %v610 = vld [vmem:[%s445 + $0x3e0] sm:$0xff]
        %v611 = vld [vmem:[%s445 + $0x3e8] sm:$0xff]
        %v612 = vld [vmem:[%s445 + $0x3f0] sm:$0xff]
        %v613 = vld [vmem:[%s445 + $0x3f8] sm:$0xff]
        %v614 = vld [vmem:[%s467] sm:$0xff]
        %v615 = vld [vmem:[%s467 + $0x8] sm:$0xff]
        %v616 = vld [vmem:[%s467 + $0x10] sm:$0xff]
        %v617 = vld [vmem:[%s467 + $0x18] sm:$0xff]
        %v618 = vld [vmem:[%s467 + $0x20] sm:$0xff]
        %v619 = vld [vmem:[%s467 + $0x28] sm:$0xff]
        %v620 = vld [vmem:[%s467 + $0x30] sm:$0xff]
        %v621 = vld [vmem:[%s467 + $0x38] sm:$0xff]
        %v622 = vld [vmem:[%s467 + $0x40] sm:$0xff]
        %v623 = vld [vmem:[%s467 + $0x48] sm:$0xff]
        %v624 = vld [vmem:[%s467 + $0x50] sm:$0xff]
        %v625 = vld [vmem:[%s467 + $0x58] sm:$0xff]
        %v626 = vld [vmem:[%s467 + $0x60] sm:$0xff]
        %v627 = vld [vmem:[%s467 + $0x68] sm:$0xff]
        %v628 = vld [vmem:[%s467 + $0x70] sm:$0xff]
        %v629 = vld [vmem:[%s467 + $0x78] sm:$0xff]
        %v630 = vld [vmem:[%s467 + $0x80] sm:$0xff]
        %v631 = vld [vmem:[%s467 + $0x88] sm:$0xff]
        %v632 = vld [vmem:[%s467 + $0x90] sm:$0xff]
        %v633 = vld [vmem:[%s467 + $0x98] sm:$0xff]
        %v634 = vld [vmem:[%s467 + $0xa0] sm:$0xff]
        %v635 = vld [vmem:[%s467 + $0xa8] sm:$0xff]
        %v636 = vld [vmem:[%s467 + $0xb0] sm:$0xff]
        %v637 = vld [vmem:[%s467 + $0xb8] sm:$0xff]
        %v638 = vld [vmem:[%s467 + $0xc0] sm:$0xff]
        %v639 = vld [vmem:[%s467 + $0xc8] sm:$0xff]
        %v640 = vld [vmem:[%s467 + $0xd0] sm:$0xff]
        %v641 = vld [vmem:[%s467 + $0xd8] sm:$0xff]
        %v642 = vld [vmem:[%s467 + $0xe0] sm:$0xff]
        %v643 = vld [vmem:[%s467 + $0xe8] sm:$0xff]
        %v644 = vld [vmem:[%s467 + $0xf0] sm:$0xff]
        %v645 = vld [vmem:[%s467 + $0xf8] sm:$0xff]
        %v646 = vld [vmem:[%s467 + $0x100] sm:$0xff]
        %v647 = vld [vmem:[%s467 + $0x108] sm:$0xff]
        %v648 = vld [vmem:[%s467 + $0x110] sm:$0xff]
        %v649 = vld [vmem:[%s467 + $0x118] sm:$0xff]
        %v650 = vld [vmem:[%s467 + $0x120] sm:$0xff]
        %v651 = vld [vmem:[%s467 + $0x128] sm:$0xff]
        %v652 = vld [vmem:[%s467 + $0x130] sm:$0xff]
        %v653 = vld [vmem:[%s467 + $0x138] sm:$0xff]
        %v654 = vld [vmem:[%s467 + $0x140] sm:$0xff]
        %v655 = vld [vmem:[%s467 + $0x148] sm:$0xff]
        %v656 = vld [vmem:[%s467 + $0x150] sm:$0xff]
        %v657 = vld [vmem:[%s467 + $0x158] sm:$0xff]
        %v658 = vld [vmem:[%s467 + $0x160] sm:$0xff]
        %v659 = vld [vmem:[%s467 + $0x168] sm:$0xff]
        %v660 = vld [vmem:[%s467 + $0x170] sm:$0xff]
        %v661 = vld [vmem:[%s467 + $0x178] sm:$0xff]
        %v662 = vld [vmem:[%s467 + $0x180] sm:$0xff]
        %v663 = vld [vmem:[%s467 + $0x188] sm:$0xff]
        %v664 = vld [vmem:[%s467 + $0x190] sm:$0xff]
        %v665 = vld [vmem:[%s467 + $0x198] sm:$0xff]
        %v666 = vld [vmem:[%s467 + $0x1a0] sm:$0xff]
        %v667 = vld [vmem:[%s467 + $0x1a8] sm:$0xff]
        %v668 = vld [vmem:[%s467 + $0x1b0] sm:$0xff]
        %v669 = vld [vmem:[%s467 + $0x1b8] sm:$0xff]
        %v670 = vld [vmem:[%s467 + $0x1c0] sm:$0xff]
        %v671 = vld [vmem:[%s467 + $0x1c8] sm:$0xff]
        %v672 = vld [vmem:[%s467 + $0x1d0] sm:$0xff]
        %v673 = vld [vmem:[%s467 + $0x1d8] sm:$0xff]
        %v674 = vld [vmem:[%s467 + $0x1e0] sm:$0xff]
        %v675 = vld [vmem:[%s467 + $0x1e8] sm:$0xff]
        %v676 = vld [vmem:[%s467 + $0x1f0] sm:$0xff]
        %v677 = vld [vmem:[%s467 + $0x1f8] sm:$0xff]
        %v678 = vld [vmem:[%s467 + $0x200] sm:$0xff]
        %v679 = vld [vmem:[%s467 + $0x208] sm:$0xff]
        %v680 = vld [vmem:[%s467 + $0x210] sm:$0xff]
        %v681 = vld [vmem:[%s467 + $0x218] sm:$0xff]
        %v682 = vld [vmem:[%s467 + $0x220] sm:$0xff]
        %v683 = vld [vmem:[%s467 + $0x228] sm:$0xff]
        %v684 = vld [vmem:[%s467 + $0x230] sm:$0xff]
        %v685 = vld [vmem:[%s467 + $0x238] sm:$0xff]
        %v686 = vld [vmem:[%s467 + $0x240] sm:$0xff]
        %v687 = vld [vmem:[%s467 + $0x248] sm:$0xff]
        %v688 = vld [vmem:[%s467 + $0x250] sm:$0xff]
        %v689 = vld [vmem:[%s467 + $0x258] sm:$0xff]
        %v690 = vld [vmem:[%s467 + $0x260] sm:$0xff]
        %v691 = vld [vmem:[%s467 + $0x268] sm:$0xff]
        %v692 = vld [vmem:[%s467 + $0x270] sm:$0xff]
        %v693 = vld [vmem:[%s467 + $0x278] sm:$0xff]
        %v694 = vld [vmem:[%s467 + $0x280] sm:$0xff]
        %v695 = vld [vmem:[%s467 + $0x288] sm:$0xff]
        %v696 = vld [vmem:[%s467 + $0x290] sm:$0xff]
        %v697 = vld [vmem:[%s467 + $0x298] sm:$0xff]
        %v698 = vld [vmem:[%s467 + $0x2a0] sm:$0xff]
        %v699 = vld [vmem:[%s467 + $0x2a8] sm:$0xff]
        %v700 = vld [vmem:[%s467 + $0x2b0] sm:$0xff]
        %v701 = vld [vmem:[%s467 + $0x2b8] sm:$0xff]
        %v702 = vld [vmem:[%s467 + $0x2c0] sm:$0xff]
        %v703 = vld [vmem:[%s467 + $0x2c8] sm:$0xff]
        %v704 = vld [vmem:[%s467 + $0x2d0] sm:$0xff]
        %v705 = vld [vmem:[%s467 + $0x2d8] sm:$0xff]
        %v706 = vld [vmem:[%s467 + $0x2e0] sm:$0xff]
        %v707 = vld [vmem:[%s467 + $0x2e8] sm:$0xff]
        %v708 = vld [vmem:[%s467 + $0x2f0] sm:$0xff]
        %v709 = vld [vmem:[%s467 + $0x2f8] sm:$0xff]
        %v710 = vld [vmem:[%s467 + $0x300] sm:$0xff]
        %v711 = vld [vmem:[%s467 + $0x308] sm:$0xff]
        %v712 = vld [vmem:[%s467 + $0x310] sm:$0xff]
        %v713 = vld [vmem:[%s467 + $0x318] sm:$0xff]
        %v714 = vld [vmem:[%s467 + $0x320] sm:$0xff]
        %v715 = vld [vmem:[%s467 + $0x328] sm:$0xff]
        %v716 = vld [vmem:[%s467 + $0x330] sm:$0xff]
        %v717 = vld [vmem:[%s467 + $0x338] sm:$0xff]
        %v718 = vld [vmem:[%s467 + $0x340] sm:$0xff]
        %v719 = vld [vmem:[%s467 + $0x348] sm:$0xff]
        %v720 = vld [vmem:[%s467 + $0x350] sm:$0xff]
        %v721 = vld [vmem:[%s467 + $0x358] sm:$0xff]
        %v722 = vld [vmem:[%s467 + $0x360] sm:$0xff]
        %v723 = vld [vmem:[%s467 + $0x368] sm:$0xff]
        %v724 = vld [vmem:[%s467 + $0x370] sm:$0xff]
        %v725 = vld [vmem:[%s467 + $0x378] sm:$0xff]
        %v726 = vld [vmem:[%s467 + $0x380] sm:$0xff]
        %v727 = vld [vmem:[%s467 + $0x388] sm:$0xff]
        %v728 = vld [vmem:[%s467 + $0x390] sm:$0xff]
        %v729 = vld [vmem:[%s467 + $0x398] sm:$0xff]
        %v730 = vld [vmem:[%s467 + $0x3a0] sm:$0xff]
        %v731 = vld [vmem:[%s467 + $0x3a8] sm:$0xff]
        %v732 = vld [vmem:[%s467 + $0x3b0] sm:$0xff]
        %v733 = vld [vmem:[%s467 + $0x3b8] sm:$0xff]
        %v734 = vld [vmem:[%s467 + $0x3c0] sm:$0xff]
        %v735 = vld [vmem:[%s467 + $0x3c8] sm:$0xff]
        %v736 = vld [vmem:[%s467 + $0x3d0] sm:$0xff]
        %v737 = vld [vmem:[%s467 + $0x3d8] sm:$0xff]
        %v738 = vld [vmem:[%s467 + $0x3e0] sm:$0xff]
        %v739 = vld [vmem:[%s467 + $0x3e8] sm:$0xff]
        %v740 = vld [vmem:[%s467 + $0x3f0] sm:$0xff]
        %v741 = vld [vmem:[%s467 + $0x3f8] sm:$0xff]
        %v742 = vld [vmem:[%s3] sm:$0xff]
        %v743 = vld [vmem:[%s4] sm:$0xff]
        %v744 = vld [vmem:[%s4 + $0x8] sm:$0xff]
        %vm745 = vcmask 261120
        %v747 = vsel %vm745, %v743, 0
        %v750 = vsel %vm745, %v744, 0
        %v753 = vsel %vm745, %v614, 0
        %v756 = vsel %vm745, %v615, 0
        %v759 = vsel %vm745, %v616, 0
        %v762 = vsel %vm745, %v617, 0
        %v765 = vsel %vm745, %v618, 0
        %v768 = vsel %vm745, %v619, 0
        %v771 = vsel %vm745, %v620, 0
        %v774 = vsel %vm745, %v621, 0
        %v777 = vsel %vm745, %v622, 0
        %v780 = vsel %vm745, %v623, 0
        %v783 = vsel %vm745, %v624, 0
        %v786 = vsel %vm745, %v625, 0
        %v789 = vsel %vm745, %v626, 0
        %v792 = vsel %vm745, %v627, 0
        %v795 = vsel %vm745, %v628, 0
        %v798 = vsel %vm745, %v629, 0
        %v801 = vsel %vm745, %v630, 0
        %v804 = vsel %vm745, %v631, 0
        %v807 = vsel %vm745, %v632, 0
        %v810 = vsel %vm745, %v633, 0
        %v813 = vsel %vm745, %v634, 0
        %v816 = vsel %vm745, %v635, 0
        %v819 = vsel %vm745, %v636, 0
        %v822 = vsel %vm745, %v637, 0
        %v825 = vsel %vm745, %v638, 0
        %v828 = vsel %vm745, %v639, 0
        %v831 = vsel %vm745, %v640, 0
        %v834 = vsel %vm745, %v641, 0
        %v837 = vsel %vm745, %v642, 0
        %v840 = vsel %vm745, %v643, 0
        %v843 = vsel %vm745, %v644, 0
        %v846 = vsel %vm745, %v645, 0
        %v849 = vsel %vm745, %v646, 0
        %v852 = vsel %vm745, %v647, 0
        %v855 = vsel %vm745, %v648, 0
        %v858 = vsel %vm745, %v649, 0
        %v861 = vsel %vm745, %v650, 0
        %v864 = vsel %vm745, %v651, 0
        %v867 = vsel %vm745, %v652, 0
        %v870 = vsel %vm745, %v653, 0
        %v873 = vsel %vm745, %v654, 0
        %v876 = vsel %vm745, %v655, 0
        %v879 = vsel %vm745, %v656, 0
        %v882 = vsel %vm745, %v657, 0
        %v885 = vsel %vm745, %v658, 0
        %v888 = vsel %vm745, %v659, 0
        %v891 = vsel %vm745, %v660, 0
        %v894 = vsel %vm745, %v661, 0
        %v897 = vsel %vm745, %v662, 0
        %v900 = vsel %vm745, %v663, 0
        %v903 = vsel %vm745, %v664, 0
        %v906 = vsel %vm745, %v665, 0
        %v909 = vsel %vm745, %v666, 0
        %v912 = vsel %vm745, %v667, 0
        %v915 = vsel %vm745, %v668, 0
        %v918 = vsel %vm745, %v669, 0
        %v921 = vsel %vm745, %v670, 0
        %v924 = vsel %vm745, %v671, 0
        %v927 = vsel %vm745, %v672, 0
        %v930 = vsel %vm745, %v673, 0
        %v933 = vsel %vm745, %v674, 0
        %v936 = vsel %vm745, %v675, 0
        %v939 = vsel %vm745, %v676, 0
        %v942 = vsel %vm745, %v677, 0
        %v945 = vsel %vm745, %v678, 0
        %v948 = vsel %vm745, %v679, 0
        %v951 = vsel %vm745, %v680, 0
        %v954 = vsel %vm745, %v681, 0
        %v957 = vsel %vm745, %v682, 0
        %v960 = vsel %vm745, %v683, 0
        %v963 = vsel %vm745, %v684, 0
        %v966 = vsel %vm745, %v685, 0
        %v969 = vsel %vm745, %v686, 0
        %v972 = vsel %vm745, %v687, 0
        %v975 = vsel %vm745, %v688, 0
        %v978 = vsel %vm745, %v689, 0
        %v981 = vsel %vm745, %v690, 0
        %v984 = vsel %vm745, %v691, 0
        %v987 = vsel %vm745, %v692, 0
        %v990 = vsel %vm745, %v693, 0
        %v993 = vsel %vm745, %v694, 0
        %v996 = vsel %vm745, %v695, 0
        %v999 = vsel %vm745, %v696, 0
        %v1002 = vsel %vm745, %v697, 0
        %v1005 = vsel %vm745, %v698, 0
        %v1008 = vsel %vm745, %v699, 0
        %v1011 = vsel %vm745, %v700, 0
        %v1014 = vsel %vm745, %v701, 0
        %v1017 = vsel %vm745, %v702, 0
        %v1020 = vsel %vm745, %v703, 0
        %v1023 = vsel %vm745, %v704, 0
        %v1026 = vsel %vm745, %v705, 0
        %v1029 = vsel %vm745, %v706, 0
        %v1032 = vsel %vm745, %v707, 0
        %v1035 = vsel %vm745, %v708, 0
        %v1038 = vsel %vm745, %v709, 0
        %v1041 = vsel %vm745, %v710, 0
        %v1044 = vsel %vm745, %v711, 0
        %v1047 = vsel %vm745, %v712, 0
        %v1050 = vsel %vm745, %v713, 0
        %v1053 = vsel %vm745, %v714, 0
        %v1056 = vsel %vm745, %v715, 0
        %v1059 = vsel %vm745, %v716, 0
        %v1062 = vsel %vm745, %v717, 0
        %v1065 = vsel %vm745, %v718, 0
        %v1068 = vsel %vm745, %v719, 0
        %v1071 = vsel %vm745, %v720, 0
        %v1074 = vsel %vm745, %v721, 0
        %v1077 = vsel %vm745, %v722, 0
        %v1080 = vsel %vm745, %v723, 0
        %v1083 = vsel %vm745, %v724, 0
        %v1086 = vsel %vm745, %v725, 0
        %v1089 = vsel %vm745, %v726, 0
        %v1092 = vsel %vm745, %v727, 0
        %v1095 = vsel %vm745, %v728, 0
        %v1098 = vsel %vm745, %v729, 0
        %v1101 = vsel %vm745, %v730, 0
        %v1104 = vsel %vm745, %v731, 0
        %v1107 = vsel %vm745, %v732, 0
        %v1110 = vsel %vm745, %v733, 0
        %v1113 = vsel %vm745, %v734, 0
        %v1116 = vsel %vm745, %v735, 0
        %v1119 = vsel %vm745, %v736, 0
        %v1122 = vsel %vm745, %v737, 0
        %v1125 = vsel %vm745, %v738, 0
        %v1128 = vsel %vm745, %v739, 0
        %v1131 = vsel %vm745, %v740, 0
        %v1134 = vsel %vm745, %v741, 0
        %1136 = vmatprep.subr.mxu0 0.0
        %1137 = vmatpush1.xpose.msra.mxu0 %v798
        %1138 = vmatprep.subr.mxu0 0.0
        %1139 = vmatpush1.xpose.msra.mxu0 %v795
        %1140 = vmatprep.subr.mxu0 0.0
        %1141 = vmatpush1.xpose.msra.mxu0 %v792
        %1142 = vmatprep.subr.mxu0 0.0
        %1143 = vmatpush1.xpose.msra.mxu0 %v789
        %1144 = vmatprep.subr.mxu0 0.0
        %1145 = vmatpush1.xpose.msra.mxu0 %v786
        %1146 = vmatprep.subr.mxu0 0.0
        %1147 = vmatpush1.xpose.msra.mxu0 %v783
        %1148 = vmatprep.subr.mxu0 0.0
        %1149 = vmatpush1.xpose.msra.mxu0 %v780
        %1150 = vmatprep.subr.mxu0 0.0
        %1151 = vmatpush1.xpose.msra.mxu0 %v777
        %1152 = vmatprep.subr.mxu0 0.0
        %1153 = vmatpush1.xpose.msra.mxu0 %v774
        %1154 = vmatprep.subr.mxu0 0.0
        %1155 = vmatpush1.xpose.msra.mxu0 %v771
        %1156 = vmatprep.subr.mxu0 0.0
        %1157 = vmatpush1.xpose.msra.mxu0 %v768
        %1158 = vmatprep.subr.mxu0 0.0
        %1159 = vmatpush1.xpose.msra.mxu0 %v765
        %1160 = vmatprep.subr.mxu0 0.0
        %1161 = vmatpush1.xpose.msra.mxu0 %v762
        %1162 = vmatprep.subr.mxu0 0.0
        %1163 = vmatpush1.xpose.msra.mxu0 %v759
        %1164 = vmatprep.subr.mxu0 0.0
        %1165 = vmatpush1.xpose.msra.mxu0 %v756
        %1166 = vmatprep.subr.mxu0 0.0
        %1167 = vmatpush1.xpose.msra.mxu0 %v753
        %1168 = vmatprep.subr.mxu0 0.0
        %1169 = vmatpush2.xpose.msra.mxu0 %v846
        %1170 = vmatprep.subr.mxu0 0.0
        %1171 = vmatpush2.xpose.msra.mxu0 %v843
        %1172 = vmatprep.subr.mxu0 0.0
        %1173 = vmatpush2.xpose.msra.mxu0 %v840
        %1174 = vmatprep.subr.mxu0 0.0
        %1175 = vmatpush2.xpose.msra.mxu0 %v837
        %1176 = vmatprep.subr.mxu0 0.0
        %1177 = vmatpush2.xpose.msra.mxu0 %v834
        %1178 = vmatprep.subr.mxu0 0.0
        %1179 = vmatpush2.xpose.msra.mxu0 %v831
        %1180 = vmatprep.subr.mxu0 0.0
        %1181 = vmatpush2.xpose.msra.mxu0 %v828
        %1182 = vmatprep.subr.mxu0 0.0
        %1183 = vmatpush2.xpose.msra.mxu0 %v825
        %1184 = vmatprep.subr.mxu0 0.0
        %1185 = vmatpush2.xpose.msra.mxu0 %v822
        %1186 = vmatprep.subr.mxu0 0.0
        %1187 = vmatpush2.xpose.msra.mxu0 %v819
        %1188 = vmatprep.subr.mxu0 0.0
        %1189 = vmatpush2.xpose.msra.mxu0 %v816
        %1190 = vmatprep.subr.mxu0 0.0
        %1191 = vmatpush2.xpose.msra.mxu0 %v813
        %1192 = vmatprep.subr.mxu0 0.0
        %1193 = vmatpush2.xpose.msra.mxu0 %v810
        %1194 = vmatprep.subr.mxu0 0.0
        %1195 = vmatpush2.xpose.msra.mxu0 %v807
        %1196 = vmatprep.subr.mxu0 0.0
        %1197 = vmatpush2.xpose.msra.mxu0 %v804
        %1198 = vmatprep.subr.mxu0 0.0
        %1199 = vmatpush2.xpose.msra.mxu0 %v801
        %1200 = vmatprep.mubr.f32.mxu0 0.0
        %1201 = vmatmul.mubr.f32.gmra.mxu0 %v747
        %v1202 = vpop.f32.mrf.mxu0
        %v1203 = vadd.f32 0.0, %v1202
        %v1204 = vpop.f32.mrf.mxu0
        %v1205 = vadd.f32 0.0, %v1204
        %1206 = vmatprep.mubr.f32.mxu0 0.0
        %1207 = vmatmul.mubr.f32.gmra.mxu0 %v750
        %v1208 = vpop.f32.mrf.mxu0
        %v1209 = vadd.f32 0.0, %v1208
        %v1210 = vpop.f32.mrf.mxu0
        %v1211 = vadd.f32 0.0, %v1210
        %1212 = vdwg.mxu0
        %1213 = vmatprep.subr.mxu0 0.0
        %1214 = vmatpush1.xpose.msra.mxu0 %v894
        %1215 = vmatprep.subr.mxu0 0.0
        %1216 = vmatpush1.xpose.msra.mxu0 %v891
        %1217 = vmatprep.subr.mxu0 0.0
        %1218 = vmatpush1.xpose.msra.mxu0 %v888
        %1219 = vmatprep.subr.mxu0 0.0
        %1220 = vmatpush1.xpose.msra.mxu0 %v885
        %1221 = vmatprep.subr.mxu0 0.0
        %1222 = vmatpush1.xpose.msra.mxu0 %v882
        %1223 = vmatprep.subr.mxu0 0.0
        %1224 = vmatpush1.xpose.msra.mxu0 %v879
        %1225 = vmatprep.subr.mxu0 0.0
        %1226 = vmatpush1.xpose.msra.mxu0 %v876
        %1227 = vmatprep.subr.mxu0 0.0
        %1228 = vmatpush1.xpose.msra.mxu0 %v873
        %1229 = vmatprep.subr.mxu0 0.0
        %1230 = vmatpush1.xpose.msra.mxu0 %v870
        %1231 = vmatprep.subr.mxu0 0.0
        %1232 = vmatpush1.xpose.msra.mxu0 %v867
        %1233 = vmatprep.subr.mxu0 0.0
        %1234 = vmatpush1.xpose.msra.mxu0 %v864
        %1235 = vmatprep.subr.mxu0 0.0
        %1236 = vmatpush1.xpose.msra.mxu0 %v861
        %1237 = vmatprep.subr.mxu0 0.0
        %1238 = vmatpush1.xpose.msra.mxu0 %v858
        %1239 = vmatprep.subr.mxu0 0.0
        %1240 = vmatpush1.xpose.msra.mxu0 %v855
        %1241 = vmatprep.subr.mxu0 0.0
        %1242 = vmatpush1.xpose.msra.mxu0 %v852
        %1243 = vmatprep.subr.mxu0 0.0
        %1244 = vmatpush1.xpose.msra.mxu0 %v849
        %1245 = vmatprep.subr.mxu0 0.0
        %1246 = vmatpush2.xpose.msra.mxu0 %v942
        %1247 = vmatprep.subr.mxu0 0.0
        %1248 = vmatpush2.xpose.msra.mxu0 %v939
        %1249 = vmatprep.subr.mxu0 0.0
        %1250 = vmatpush2.xpose.msra.mxu0 %v936
        %1251 = vmatprep.subr.mxu0 0.0
        %1252 = vmatpush2.xpose.msra.mxu0 %v933
        %1253 = vmatprep.subr.mxu0 0.0
        %1254 = vmatpush2.xpose.msra.mxu0 %v930
        %1255 = vmatprep.subr.mxu0 0.0
        %1256 = vmatpush2.xpose.msra.mxu0 %v927
        %1257 = vmatprep.subr.mxu0 0.0
        %1258 = vmatpush2.xpose.msra.mxu0 %v924
        %1259 = vmatprep.subr.mxu0 0.0
        %1260 = vmatpush2.xpose.msra.mxu0 %v921
        %1261 = vmatprep.subr.mxu0 0.0
        %1262 = vmatpush2.xpose.msra.mxu0 %v918
        %1263 = vmatprep.subr.mxu0 0.0
        %1264 = vmatpush2.xpose.msra.mxu0 %v915
        %1265 = vmatprep.subr.mxu0 0.0
        %1266 = vmatpush2.xpose.msra.mxu0 %v912
        %1267 = vmatprep.subr.mxu0 0.0
        %1268 = vmatpush2.xpose.msra.mxu0 %v909
        %1269 = vmatprep.subr.mxu0 0.0
        %1270 = vmatpush2.xpose.msra.mxu0 %v906
        %1271 = vmatprep.subr.mxu0 0.0
        %1272 = vmatpush2.xpose.msra.mxu0 %v903
        %1273 = vmatprep.subr.mxu0 0.0
        %1274 = vmatpush2.xpose.msra.mxu0 %v900
        %1275 = vmatprep.subr.mxu0 0.0
        %1276 = vmatpush2.xpose.msra.mxu0 %v897
        %1277 = vmatprep.mubr.f32.mxu0 0.0
        %1278 = vmatmul.mubr.f32.gmra.mxu0 %v747
        %v1279 = vpop.f32.mrf.mxu0
        %v1280 = vadd.f32 0.0, %v1279
        %v1281 = vpop.f32.mrf.mxu0
        %v1282 = vadd.f32 0.0, %v1281
        %1283 = vmatprep.mubr.f32.mxu0 0.0
        %1284 = vmatmul.mubr.f32.gmra.mxu0 %v750
        %v1285 = vpop.f32.mrf.mxu0
        %v1286 = vadd.f32 0.0, %v1285
        %v1287 = vpop.f32.mrf.mxu0
        %v1288 = vadd.f32 0.0, %v1287
        %1289 = vdwg.mxu0
        %1290 = vmatprep.subr.mxu0 0.0
        %1291 = vmatpush1.xpose.msra.mxu0 %v990
        %1292 = vmatprep.subr.mxu0 0.0
        %1293 = vmatpush1.xpose.msra.mxu0 %v987
        %1294 = vmatprep.subr.mxu0 0.0
        %1295 = vmatpush1.xpose.msra.mxu0 %v984
        %1296 = vmatprep.subr.mxu0 0.0
        %1297 = vmatpush1.xpose.msra.mxu0 %v981
        %1298 = vmatprep.subr.mxu0 0.0
        %1299 = vmatpush1.xpose.msra.mxu0 %v978
        %1300 = vmatprep.subr.mxu0 0.0
        %1301 = vmatpush1.xpose.msra.mxu0 %v975
        %1302 = vmatprep.subr.mxu0 0.0
        %1303 = vmatpush1.xpose.msra.mxu0 %v972
        %1304 = vmatprep.subr.mxu0 0.0
        %1305 = vmatpush1.xpose.msra.mxu0 %v969
        %1306 = vmatprep.subr.mxu0 0.0
        %1307 = vmatpush1.xpose.msra.mxu0 %v966
        %1308 = vmatprep.subr.mxu0 0.0
        %1309 = vmatpush1.xpose.msra.mxu0 %v963
        %1310 = vmatprep.subr.mxu0 0.0
        %1311 = vmatpush1.xpose.msra.mxu0 %v960
        %1312 = vmatprep.subr.mxu0 0.0
        %1313 = vmatpush1.xpose.msra.mxu0 %v957
        %1314 = vmatprep.subr.mxu0 0.0
        %1315 = vmatpush1.xpose.msra.mxu0 %v954
        %1316 = vmatprep.subr.mxu0 0.0
        %1317 = vmatpush1.xpose.msra.mxu0 %v951
        %1318 = vmatprep.subr.mxu0 0.0
        %1319 = vmatpush1.xpose.msra.mxu0 %v948
        %1320 = vmatprep.subr.mxu0 0.0
        %1321 = vmatpush1.xpose.msra.mxu0 %v945
        %1322 = vmatprep.subr.mxu0 0.0
        %1323 = vmatpush2.xpose.msra.mxu0 %v1038
        %1324 = vmatprep.subr.mxu0 0.0
        %1325 = vmatpush2.xpose.msra.mxu0 %v1035
        %1326 = vmatprep.subr.mxu0 0.0
        %1327 = vmatpush2.xpose.msra.mxu0 %v1032
        %1328 = vmatprep.subr.mxu0 0.0
        %1329 = vmatpush2.xpose.msra.mxu0 %v1029
        %1330 = vmatprep.subr.mxu0 0.0
        %1331 = vmatpush2.xpose.msra.mxu0 %v1026
        %1332 = vmatprep.subr.mxu0 0.0
        %1333 = vmatpush2.xpose.msra.mxu0 %v1023
        %1334 = vmatprep.subr.mxu0 0.0
        %1335 = vmatpush2.xpose.msra.mxu0 %v1020
        %1336 = vmatprep.subr.mxu0 0.0
        %1337 = vmatpush2.xpose.msra.mxu0 %v1017
        %1338 = vmatprep.subr.mxu0 0.0
        %1339 = vmatpush2.xpose.msra.mxu0 %v1014
        %1340 = vmatprep.subr.mxu0 0.0
        %1341 = vmatpush2.xpose.msra.mxu0 %v1011
        %1342 = vmatprep.subr.mxu0 0.0
        %1343 = vmatpush2.xpose.msra.mxu0 %v1008
        %1344 = vmatprep.subr.mxu0 0.0
        %1345 = vmatpush2.xpose.msra.mxu0 %v1005
        %1346 = vmatprep.subr.mxu0 0.0
        %1347 = vmatpush2.xpose.msra.mxu0 %v1002
        %1348 = vmatprep.subr.mxu0 0.0
        %1349 = vmatpush2.xpose.msra.mxu0 %v999
        %1350 = vmatprep.subr.mxu0 0.0
        %1351 = vmatpush2.xpose.msra.mxu0 %v996
        %1352 = vmatprep.subr.mxu0 0.0
        %1353 = vmatpush2.xpose.msra.mxu0 %v993
        %1354 = vmatprep.mubr.f32.mxu0 0.0
        %1355 = vmatmul.mubr.f32.gmra.mxu0 %v747
        %v1356 = vpop.f32.mrf.mxu0
        %v1357 = vadd.f32 0.0, %v1356
        %v1358 = vpop.f32.mrf.mxu0
        %v1359 = vadd.f32 0.0, %v1358
        %1360 = vmatprep.mubr.f32.mxu0 0.0
        %1361 = vmatmul.mubr.f32.gmra.mxu0 %v750
        %v1362 = vpop.f32.mrf.mxu0
        %v1363 = vadd.f32 0.0, %v1362
        %v1364 = vpop.f32.mrf.mxu0
        %v1365 = vadd.f32 0.0, %v1364
        %1366 = vdwg.mxu0
        %1367 = vmatprep.subr.mxu0 0.0
        %1368 = vmatpush1.xpose.msra.mxu0 %v1086
        %1369 = vmatprep.subr.mxu0 0.0
        %1370 = vmatpush1.xpose.msra.mxu0 %v1083
        %1371 = vmatprep.subr.mxu0 0.0
        %1372 = vmatpush1.xpose.msra.mxu0 %v1080
        %1373 = vmatprep.subr.mxu0 0.0
        %1374 = vmatpush1.xpose.msra.mxu0 %v1077
        %1375 = vmatprep.subr.mxu0 0.0
        %1376 = vmatpush1.xpose.msra.mxu0 %v1074
        %1377 = vmatprep.subr.mxu0 0.0
        %1378 = vmatpush1.xpose.msra.mxu0 %v1071
        %1379 = vmatprep.subr.mxu0 0.0
        %1380 = vmatpush1.xpose.msra.mxu0 %v1068
        %1381 = vmatprep.subr.mxu0 0.0
        %1382 = vmatpush1.xpose.msra.mxu0 %v1065
        %1383 = vmatprep.subr.mxu0 0.0
        %1384 = vmatpush1.xpose.msra.mxu0 %v1062
        %1385 = vmatprep.subr.mxu0 0.0
        %1386 = vmatpush1.xpose.msra.mxu0 %v1059
        %1387 = vmatprep.subr.mxu0 0.0
        %1388 = vmatpush1.xpose.msra.mxu0 %v1056
        %1389 = vmatprep.subr.mxu0 0.0
        %1390 = vmatpush1.xpose.msra.mxu0 %v1053
        %1391 = vmatprep.subr.mxu0 0.0
        %1392 = vmatpush1.xpose.msra.mxu0 %v1050
        %1393 = vmatprep.subr.mxu0 0.0
        %1394 = vmatpush1.xpose.msra.mxu0 %v1047
        %1395 = vmatprep.subr.mxu0 0.0
        %1396 = vmatpush1.xpose.msra.mxu0 %v1044
        %1397 = vmatprep.subr.mxu0 0.0
        %1398 = vmatpush1.xpose.msra.mxu0 %v1041
        %1399 = vmatprep.subr.mxu0 0.0
        %1400 = vmatpush2.xpose.msra.mxu0 %v1134
        %1401 = vmatprep.subr.mxu0 0.0
        %1402 = vmatpush2.xpose.msra.mxu0 %v1131
        %1403 = vmatprep.subr.mxu0 0.0
        %1404 = vmatpush2.xpose.msra.mxu0 %v1128
        %1405 = vmatprep.subr.mxu0 0.0
        %1406 = vmatpush2.xpose.msra.mxu0 %v1125
        %1407 = vmatprep.subr.mxu0 0.0
        %1408 = vmatpush2.xpose.msra.mxu0 %v1122
        %1409 = vmatprep.subr.mxu0 0.0
        %1410 = vmatpush2.xpose.msra.mxu0 %v1119
        %1411 = vmatprep.subr.mxu0 0.0
        %1412 = vmatpush2.xpose.msra.mxu0 %v1116
        %1413 = vmatprep.subr.mxu0 0.0
        %1414 = vmatpush2.xpose.msra.mxu0 %v1113
        %1415 = vmatprep.subr.mxu0 0.0
        %1416 = vmatpush2.xpose.msra.mxu0 %v1110
        %1417 = vmatprep.subr.mxu0 0.0
        %1418 = vmatpush2.xpose.msra.mxu0 %v1107
        %1419 = vmatprep.subr.mxu0 0.0
        %1420 = vmatpush2.xpose.msra.mxu0 %v1104
        %1421 = vmatprep.subr.mxu0 0.0
        %1422 = vmatpush2.xpose.msra.mxu0 %v1101
        %1423 = vmatprep.subr.mxu0 0.0
        %1424 = vmatpush2.xpose.msra.mxu0 %v1098
        %1425 = vmatprep.subr.mxu0 0.0
        %1426 = vmatpush2.xpose.msra.mxu0 %v1095
        %1427 = vmatprep.subr.mxu0 0.0
        %1428 = vmatpush2.xpose.msra.mxu0 %v1092
        %1429 = vmatprep.subr.mxu0 0.0
        %1430 = vmatpush2.xpose.msra.mxu0 %v1089
        %1431 = vmatprep.mubr.f32.mxu0 0.0
        %1432 = vmatmul.mubr.f32.gmra.mxu0 %v747
        %v1433 = vpop.f32.mrf.mxu0
        %v1434 = vadd.f32 0.0, %v1433
        %v1435 = vpop.f32.mrf.mxu0
        %v1436 = vadd.f32 0.0, %v1435
        %1437 = vmatprep.mubr.f32.mxu0 0.0
        %1438 = vmatmul.mubr.f32.gmra.mxu0 %v750
        %v1439 = vpop.f32.mrf.mxu0
        %v1440 = vadd.f32 0.0, %v1439
        %v1441 = vpop.f32.mrf.mxu0
        %v1442 = vadd.f32 0.0, %v1441
        %1443 = vdwg.mxu0
        %v1445 = vsel %vm745, %v742, 0
        %v1448 = vsel %vm745, %v486, 0
        %v1451 = vsel %vm745, %v487, 0
        %v1454 = vsel %vm745, %v488, 0
        %v1457 = vsel %vm745, %v489, 0
        %v1460 = vsel %vm745, %v490, 0
        %v1463 = vsel %vm745, %v491, 0
        %v1466 = vsel %vm745, %v492, 0
        %v1469 = vsel %vm745, %v493, 0
        %v1472 = vsel %vm745, %v494, 0
        %v1475 = vsel %vm745, %v495, 0
        %v1478 = vsel %vm745, %v496, 0
        %v1481 = vsel %vm745, %v497, 0
        %v1484 = vsel %vm745, %v498, 0
        %v1487 = vsel %vm745, %v499, 0
        %v1490 = vsel %vm745, %v500, 0
        %v1493 = vsel %vm745, %v501, 0
        %v1496 = vsel %vm745, %v502, 0
        %v1499 = vsel %vm745, %v503, 0
        %v1502 = vsel %vm745, %v504, 0
        %v1505 = vsel %vm745, %v505, 0
        %v1508 = vsel %vm745, %v506, 0
        %v1511 = vsel %vm745, %v507, 0
        %v1514 = vsel %vm745, %v508, 0
        %v1517 = vsel %vm745, %v509, 0
        %v1520 = vsel %vm745, %v510, 0
        %v1523 = vsel %vm745, %v511, 0
        %v1526 = vsel %vm745, %v512, 0
        %v1529 = vsel %vm745, %v513, 0
        %v1532 = vsel %vm745, %v514, 0
        %v1535 = vsel %vm745, %v515, 0
        %v1538 = vsel %vm745, %v516, 0
        %v1541 = vsel %vm745, %v517, 0
        %v1544 = vsel %vm745, %v518, 0
        %v1547 = vsel %vm745, %v519, 0
        %v1550 = vsel %vm745, %v520, 0
        %v1553 = vsel %vm745, %v521, 0
        %v1556 = vsel %vm745, %v522, 0
        %v1559 = vsel %vm745, %v523, 0
        %v1562 = vsel %vm745, %v524, 0
        %v1565 = vsel %vm745, %v525, 0
        %v1568 = vsel %vm745, %v526, 0
        %v1571 = vsel %vm745, %v527, 0
        %v1574 = vsel %vm745, %v528, 0
        %v1577 = vsel %vm745, %v529, 0
        %v1580 = vsel %vm745, %v530, 0
        %v1583 = vsel %vm745, %v531, 0
        %v1586 = vsel %vm745, %v532, 0
        %v1589 = vsel %vm745, %v533, 0
        %v1592 = vsel %vm745, %v534, 0
        %v1595 = vsel %vm745, %v535, 0
        %v1598 = vsel %vm745, %v536, 0
        %v1601 = vsel %vm745, %v537, 0
        %v1604 = vsel %vm745, %v538, 0
        %v1607 = vsel %vm745, %v539, 0
        %v1610 = vsel %vm745, %v540, 0
        %v1613 = vsel %vm745, %v541, 0
        %v1616 = vsel %vm745, %v542, 0
        %v1619 = vsel %vm745, %v543, 0
        %v1622 = vsel %vm745, %v544, 0
        %v1625 = vsel %vm745, %v545, 0
        %v1628 = vsel %vm745, %v546, 0
        %v1631 = vsel %vm745, %v547, 0
        %v1634 = vsel %vm745, %v548, 0
        %v1637 = vsel %vm745, %v549, 0
        %v1640 = vsel %vm745, %v550, 0
        %v1643 = vsel %vm745, %v551, 0
        %v1646 = vsel %vm745, %v552, 0
        %v1649 = vsel %vm745, %v553, 0
        %v1652 = vsel %vm745, %v554, 0
        %v1655 = vsel %vm745, %v555, 0
        %v1658 = vsel %vm745, %v556, 0
        %v1661 = vsel %vm745, %v557, 0
        %v1664 = vsel %vm745, %v558, 0
        %v1667 = vsel %vm745, %v559, 0
        %v1670 = vsel %vm745, %v560, 0
        %v1673 = vsel %vm745, %v561, 0
        %v1676 = vsel %vm745, %v562, 0
        %v1679 = vsel %vm745, %v563, 0
        %v1682 = vsel %vm745, %v564, 0
        %v1685 = vsel %vm745, %v565, 0
        %v1688 = vsel %vm745, %v566, 0
        %v1691 = vsel %vm745, %v567, 0
        %v1694 = vsel %vm745, %v568, 0
        %v1697 = vsel %vm745, %v569, 0
        %v1700 = vsel %vm745, %v570, 0
        %v1703 = vsel %vm745, %v571, 0
        %v1706 = vsel %vm745, %v572, 0
        %v1709 = vsel %vm745, %v573, 0
        %v1712 = vsel %vm745, %v574, 0
        %v1715 = vsel %vm745, %v575, 0
        %v1718 = vsel %vm745, %v576, 0
        %v1721 = vsel %vm745, %v577, 0
        %v1724 = vsel %vm745, %v578, 0
        %v1727 = vsel %vm745, %v579, 0
        %v1730 = vsel %vm745, %v580, 0
        %v1733 = vsel %vm745, %v581, 0
        %v1736 = vsel %vm745, %v582, 0
        %v1739 = vsel %vm745, %v583, 0
        %v1742 = vsel %vm745, %v584, 0
        %v1745 = vsel %vm745, %v585, 0
        %v1748 = vsel %vm745, %v586, 0
        %v1751 = vsel %vm745, %v587, 0
        %v1754 = vsel %vm745, %v588, 0
        %v1757 = vsel %vm745, %v589, 0
        %v1760 = vsel %vm745, %v590, 0
        %v1763 = vsel %vm745, %v591, 0
        %v1766 = vsel %vm745, %v592, 0
        %v1769 = vsel %vm745, %v593, 0
        %v1772 = vsel %vm745, %v594, 0
        %v1775 = vsel %vm745, %v595, 0
        %v1778 = vsel %vm745, %v596, 0
        %v1781 = vsel %vm745, %v597, 0
        %v1784 = vsel %vm745, %v598, 0
        %v1787 = vsel %vm745, %v599, 0
        %v1790 = vsel %vm745, %v600, 0
        %v1793 = vsel %vm745, %v601, 0
        %v1796 = vsel %vm745, %v602, 0
        %v1799 = vsel %vm745, %v603, 0
        %v1802 = vsel %vm745, %v604, 0
        %v1805 = vsel %vm745, %v605, 0
        %v1808 = vsel %vm745, %v606, 0
        %v1811 = vsel %vm745, %v607, 0
        %v1814 = vsel %vm745, %v608, 0
        %v1817 = vsel %vm745, %v609, 0
        %v1820 = vsel %vm745, %v610, 0
        %v1823 = vsel %vm745, %v611, 0
        %v1826 = vsel %vm745, %v612, 0
        %v1829 = vsel %vm745, %v613, 0
        %1831 = vmatprep.subr.mxu0 0.0
        %1832 = vmatpush1.xpose.msra.mxu0 %v1493
        %1833 = vmatprep.subr.mxu0 0.0
        %1834 = vmatpush1.xpose.msra.mxu0 %v1490
        %1835 = vmatprep.subr.mxu0 0.0
        %1836 = vmatpush1.xpose.msra.mxu0 %v1487
        %1837 = vmatprep.subr.mxu0 0.0
        %1838 = vmatpush1.xpose.msra.mxu0 %v1484
        %1839 = vmatprep.subr.mxu0 0.0
        %1840 = vmatpush1.xpose.msra.mxu0 %v1481
        %1841 = vmatprep.subr.mxu0 0.0
        %1842 = vmatpush1.xpose.msra.mxu0 %v1478
        %1843 = vmatprep.subr.mxu0 0.0
        %1844 = vmatpush1.xpose.msra.mxu0 %v1475
        %1845 = vmatprep.subr.mxu0 0.0
        %1846 = vmatpush1.xpose.msra.mxu0 %v1472
        %1847 = vmatprep.subr.mxu0 0.0
        %1848 = vmatpush1.xpose.msra.mxu0 %v1469
        %1849 = vmatprep.subr.mxu0 0.0
        %1850 = vmatpush1.xpose.msra.mxu0 %v1466
        %1851 = vmatprep.subr.mxu0 0.0
        %1852 = vmatpush1.xpose.msra.mxu0 %v1463
        %1853 = vmatprep.subr.mxu0 0.0
        %1854 = vmatpush1.xpose.msra.mxu0 %v1460
        %1855 = vmatprep.subr.mxu0 0.0
        %1856 = vmatpush1.xpose.msra.mxu0 %v1457
        %1857 = vmatprep.subr.mxu0 0.0
        %1858 = vmatpush1.xpose.msra.mxu0 %v1454
        %1859 = vmatprep.subr.mxu0 0.0
        %1860 = vmatpush1.xpose.msra.mxu0 %v1451
        %1861 = vmatprep.subr.mxu0 0.0
        %1862 = vmatpush1.xpose.msra.mxu0 %v1448
        %1863 = vmatprep.subr.mxu0 0.0
        %1864 = vmatpush2.xpose.msra.mxu0 %v1541
        %1865 = vmatprep.subr.mxu0 0.0
        %1866 = vmatpush2.xpose.msra.mxu0 %v1538
        %1867 = vmatprep.subr.mxu0 0.0
        %1868 = vmatpush2.xpose.msra.mxu0 %v1535
        %1869 = vmatprep.subr.mxu0 0.0
        %1870 = vmatpush2.xpose.msra.mxu0 %v1532
        %1871 = vmatprep.subr.mxu0 0.0
        %1872 = vmatpush2.xpose.msra.mxu0 %v1529
        %1873 = vmatprep.subr.mxu0 0.0
        %1874 = vmatpush2.xpose.msra.mxu0 %v1526
        %1875 = vmatprep.subr.mxu0 0.0
        %1876 = vmatpush2.xpose.msra.mxu0 %v1523
        %1877 = vmatprep.subr.mxu0 0.0
        %1878 = vmatpush2.xpose.msra.mxu0 %v1520
        %1879 = vmatprep.subr.mxu0 0.0
        %1880 = vmatpush2.xpose.msra.mxu0 %v1517
        %1881 = vmatprep.subr.mxu0 0.0
        %1882 = vmatpush2.xpose.msra.mxu0 %v1514
        %1883 = vmatprep.subr.mxu0 0.0
        %1884 = vmatpush2.xpose.msra.mxu0 %v1511
        %1885 = vmatprep.subr.mxu0 0.0
        %1886 = vmatpush2.xpose.msra.mxu0 %v1508
        %1887 = vmatprep.subr.mxu0 0.0
        %1888 = vmatpush2.xpose.msra.mxu0 %v1505
        %1889 = vmatprep.subr.mxu0 0.0
        %1890 = vmatpush2.xpose.msra.mxu0 %v1502
        %1891 = vmatprep.subr.mxu0 0.0
        %1892 = vmatpush2.xpose.msra.mxu0 %v1499
        %1893 = vmatprep.subr.mxu0 0.0
        %1894 = vmatpush2.xpose.msra.mxu0 %v1496
        %1895 = vmatprep.mubr.f32.mxu0 0.0
        %1896 = vmatmul.mubr.f32.gmra.mxu0 %v1445
        %v1897 = vpop.f32.mrf.mxu0
        %v1898 = vadd.f32 %v1203, %v1897
        %v1899 = vpop.f32.mrf.mxu0
        %v1900 = vadd.f32 %v1205, %v1899
        %1901 = vdwg.mxu0
        %1902 = vmatprep.subr.mxu0 0.0
        %1903 = vmatpush1.xpose.msra.mxu0 %v1589
        %1904 = vmatprep.subr.mxu0 0.0
        %1905 = vmatpush1.xpose.msra.mxu0 %v1586
        %1906 = vmatprep.subr.mxu0 0.0
        %1907 = vmatpush1.xpose.msra.mxu0 %v1583
        %1908 = vmatprep.subr.mxu0 0.0
        %1909 = vmatpush1.xpose.msra.mxu0 %v1580
        %1910 = vmatprep.subr.mxu0 0.0
        %1911 = vmatpush1.xpose.msra.mxu0 %v1577
        %1912 = vmatprep.subr.mxu0 0.0
        %1913 = vmatpush1.xpose.msra.mxu0 %v1574
        %1914 = vmatprep.subr.mxu0 0.0
        %1915 = vmatpush1.xpose.msra.mxu0 %v1571
        %1916 = vmatprep.subr.mxu0 0.0
        %1917 = vmatpush1.xpose.msra.mxu0 %v1568
        %1918 = vmatprep.subr.mxu0 0.0
        %1919 = vmatpush1.xpose.msra.mxu0 %v1565
        %1920 = vmatprep.subr.mxu0 0.0
        %1921 = vmatpush1.xpose.msra.mxu0 %v1562
        %1922 = vmatprep.subr.mxu0 0.0
        %1923 = vmatpush1.xpose.msra.mxu0 %v1559
        %1924 = vmatprep.subr.mxu0 0.0
        %1925 = vmatpush1.xpose.msra.mxu0 %v1556
        %1926 = vmatprep.subr.mxu0 0.0
        %1927 = vmatpush1.xpose.msra.mxu0 %v1553
        %1928 = vmatprep.subr.mxu0 0.0
        %1929 = vmatpush1.xpose.msra.mxu0 %v1550
        %1930 = vmatprep.subr.mxu0 0.0
        %1931 = vmatpush1.xpose.msra.mxu0 %v1547
        %1932 = vmatprep.subr.mxu0 0.0
        %1933 = vmatpush1.xpose.msra.mxu0 %v1544
        %1934 = vmatprep.subr.mxu0 0.0
        %1935 = vmatpush2.xpose.msra.mxu0 %v1637
        %1936 = vmatprep.subr.mxu0 0.0
        %1937 = vmatpush2.xpose.msra.mxu0 %v1634
        %1938 = vmatprep.subr.mxu0 0.0
        %1939 = vmatpush2.xpose.msra.mxu0 %v1631
        %1940 = vmatprep.subr.mxu0 0.0
        %1941 = vmatpush2.xpose.msra.mxu0 %v1628
        %1942 = vmatprep.subr.mxu0 0.0
        %1943 = vmatpush2.xpose.msra.mxu0 %v1625
        %1944 = vmatprep.subr.mxu0 0.0
        %1945 = vmatpush2.xpose.msra.mxu0 %v1622
        %1946 = vmatprep.subr.mxu0 0.0
        %1947 = vmatpush2.xpose.msra.mxu0 %v1619
        %1948 = vmatprep.subr.mxu0 0.0
        %1949 = vmatpush2.xpose.msra.mxu0 %v1616
        %1950 = vmatprep.subr.mxu0 0.0
        %1951 = vmatpush2.xpose.msra.mxu0 %v1613
        %1952 = vmatprep.subr.mxu0 0.0
        %1953 = vmatpush2.xpose.msra.mxu0 %v1610
        %1954 = vmatprep.subr.mxu0 0.0
        %1955 = vmatpush2.xpose.msra.mxu0 %v1607
        %1956 = vmatprep.subr.mxu0 0.0
        %1957 = vmatpush2.xpose.msra.mxu0 %v1604
        %1958 = vmatprep.subr.mxu0 0.0
        %1959 = vmatpush2.xpose.msra.mxu0 %v1601
        %1960 = vmatprep.subr.mxu0 0.0
        %1961 = vmatpush2.xpose.msra.mxu0 %v1598
        %1962 = vmatprep.subr.mxu0 0.0
        %1963 = vmatpush2.xpose.msra.mxu0 %v1595
        %1964 = vmatprep.subr.mxu0 0.0
        %1965 = vmatpush2.xpose.msra.mxu0 %v1592
        %1966 = vmatprep.mubr.f32.mxu0 0.0
        %1967 = vmatmul.mubr.f32.gmra.mxu0 %v1445
        %v1968 = vpop.f32.mrf.mxu0
        %v1969 = vadd.f32 %v1280, %v1968
        %v1970 = vpop.f32.mrf.mxu0
        %v1971 = vadd.f32 %v1282, %v1970
        %1972 = vdwg.mxu0
        %1973 = vmatprep.subr.mxu0 0.0
        %1974 = vmatpush1.xpose.msra.mxu0 %v1685
        %1975 = vmatprep.subr.mxu0 0.0
        %1976 = vmatpush1.xpose.msra.mxu0 %v1682
        %1977 = vmatprep.subr.mxu0 0.0
        %1978 = vmatpush1.xpose.msra.mxu0 %v1679
        %1979 = vmatprep.subr.mxu0 0.0
        %1980 = vmatpush1.xpose.msra.mxu0 %v1676
        %1981 = vmatprep.subr.mxu0 0.0
        %1982 = vmatpush1.xpose.msra.mxu0 %v1673
        %1983 = vmatprep.subr.mxu0 0.0
        %1984 = vmatpush1.xpose.msra.mxu0 %v1670
        %1985 = vmatprep.subr.mxu0 0.0
        %1986 = vmatpush1.xpose.msra.mxu0 %v1667
        %1987 = vmatprep.subr.mxu0 0.0
        %1988 = vmatpush1.xpose.msra.mxu0 %v1664
        %1989 = vmatprep.subr.mxu0 0.0
        %1990 = vmatpush1.xpose.msra.mxu0 %v1661
        %1991 = vmatprep.subr.mxu0 0.0
        %1992 = vmatpush1.xpose.msra.mxu0 %v1658
        %1993 = vmatprep.subr.mxu0 0.0
        %1994 = vmatpush1.xpose.msra.mxu0 %v1655
        %1995 = vmatprep.subr.mxu0 0.0
        %1996 = vmatpush1.xpose.msra.mxu0 %v1652
        %1997 = vmatprep.subr.mxu0 0.0
        %1998 = vmatpush1.xpose.msra.mxu0 %v1649
        %1999 = vmatprep.subr.mxu0 0.0
        %2000 = vmatpush1.xpose.msra.mxu0 %v1646
        %2001 = vmatprep.subr.mxu0 0.0
        %2002 = vmatpush1.xpose.msra.mxu0 %v1643
        %2003 = vmatprep.subr.mxu0 0.0
        %2004 = vmatpush1.xpose.msra.mxu0 %v1640
        %2005 = vmatprep.subr.mxu0 0.0
        %2006 = vmatpush2.xpose.msra.mxu0 %v1733
        %2007 = vmatprep.subr.mxu0 0.0
        %2008 = vmatpush2.xpose.msra.mxu0 %v1730
        %2009 = vmatprep.subr.mxu0 0.0
        %2010 = vmatpush2.xpose.msra.mxu0 %v1727
        %2011 = vmatprep.subr.mxu0 0.0
        %2012 = vmatpush2.xpose.msra.mxu0 %v1724
        %2013 = vmatprep.subr.mxu0 0.0
        %2014 = vmatpush2.xpose.msra.mxu0 %v1721
        %2015 = vmatprep.subr.mxu0 0.0
        %2016 = vmatpush2.xpose.msra.mxu0 %v1718
        %2017 = vmatprep.subr.mxu0 0.0
        %2018 = vmatpush2.xpose.msra.mxu0 %v1715
        %2019 = vmatprep.subr.mxu0 0.0
        %2020 = vmatpush2.xpose.msra.mxu0 %v1712
        %2021 = vmatprep.subr.mxu0 0.0
        %2022 = vmatpush2.xpose.msra.mxu0 %v1709
        %2023 = vmatprep.subr.mxu0 0.0
        %2024 = vmatpush2.xpose.msra.mxu0 %v1706
        %2025 = vmatprep.subr.mxu0 0.0
        %2026 = vmatpush2.xpose.msra.mxu0 %v1703
        %2027 = vmatprep.subr.mxu0 0.0
        %2028 = vmatpush2.xpose.msra.mxu0 %v1700
        %2029 = vmatprep.subr.mxu0 0.0
        %2030 = vmatpush2.xpose.msra.mxu0 %v1697
        %2031 = vmatprep.subr.mxu0 0.0
        %2032 = vmatpush2.xpose.msra.mxu0 %v1694
        %2033 = vmatprep.subr.mxu0 0.0
        %2034 = vmatpush2.xpose.msra.mxu0 %v1691
        %2035 = vmatprep.subr.mxu0 0.0
        %2036 = vmatpush2.xpose.msra.mxu0 %v1688
        %2037 = vmatprep.mubr.f32.mxu0 0.0
        %2038 = vmatmul.mubr.f32.gmra.mxu0 %v1445
        %v2039 = vpop.f32.mrf.mxu0
        %v2040 = vadd.f32 %v1357, %v2039
        %v2041 = vpop.f32.mrf.mxu0
        %v2042 = vadd.f32 %v1359, %v2041
        %2043 = vdwg.mxu0
        %2044 = vmatprep.subr.mxu0 0.0
        %2045 = vmatpush1.xpose.msra.mxu0 %v1781
        %2046 = vmatprep.subr.mxu0 0.0
        %2047 = vmatpush1.xpose.msra.mxu0 %v1778
        %2048 = vmatprep.subr.mxu0 0.0
        %2049 = vmatpush1.xpose.msra.mxu0 %v1775
        %2050 = vmatprep.subr.mxu0 0.0
        %2051 = vmatpush1.xpose.msra.mxu0 %v1772
        %2052 = vmatprep.subr.mxu0 0.0
        %2053 = vmatpush1.xpose.msra.mxu0 %v1769
        %2054 = vmatprep.subr.mxu0 0.0
        %2055 = vmatpush1.xpose.msra.mxu0 %v1766
        %2056 = vmatprep.subr.mxu0 0.0
        %2057 = vmatpush1.xpose.msra.mxu0 %v1763
        %2058 = vmatprep.subr.mxu0 0.0
        %2059 = vmatpush1.xpose.msra.mxu0 %v1760
        %2060 = vmatprep.subr.mxu0 0.0
        %2061 = vmatpush1.xpose.msra.mxu0 %v1757
        %2062 = vmatprep.subr.mxu0 0.0
        %2063 = vmatpush1.xpose.msra.mxu0 %v1754
        %2064 = vmatprep.subr.mxu0 0.0
        %2065 = vmatpush1.xpose.msra.mxu0 %v1751
        %2066 = vmatprep.subr.mxu0 0.0
        %2067 = vmatpush1.xpose.msra.mxu0 %v1748
        %2068 = vmatprep.subr.mxu0 0.0
        %2069 = vmatpush1.xpose.msra.mxu0 %v1745
        %2070 = vmatprep.subr.mxu0 0.0
        %2071 = vmatpush1.xpose.msra.mxu0 %v1742
        %2072 = vmatprep.subr.mxu0 0.0
        %2073 = vmatpush1.xpose.msra.mxu0 %v1739
        %2074 = vmatprep.subr.mxu0 0.0
        %2075 = vmatpush1.xpose.msra.mxu0 %v1736
        %2076 = vmatprep.subr.mxu0 0.0
        %2077 = vmatpush2.xpose.msra.mxu0 %v1829
        %2078 = vmatprep.subr.mxu0 0.0
        %2079 = vmatpush2.xpose.msra.mxu0 %v1826
        %2080 = vmatprep.subr.mxu0 0.0
        %2081 = vmatpush2.xpose.msra.mxu0 %v1823
        %2082 = vmatprep.subr.mxu0 0.0
        %2083 = vmatpush2.xpose.msra.mxu0 %v1820
        %2084 = vmatprep.subr.mxu0 0.0
        %2085 = vmatpush2.xpose.msra.mxu0 %v1817
        %2086 = vmatprep.subr.mxu0 0.0
        %2087 = vmatpush2.xpose.msra.mxu0 %v1814
        %2088 = vmatprep.subr.mxu0 0.0
        %2089 = vmatpush2.xpose.msra.mxu0 %v1811
        %2090 = vmatprep.subr.mxu0 0.0
        %2091 = vmatpush2.xpose.msra.mxu0 %v1808
        %2092 = vmatprep.subr.mxu0 0.0
        %2093 = vmatpush2.xpose.msra.mxu0 %v1805
        %2094 = vmatprep.subr.mxu0 0.0
        %2095 = vmatpush2.xpose.msra.mxu0 %v1802
        %2096 = vmatprep.subr.mxu0 0.0
        %2097 = vmatpush2.xpose.msra.mxu0 %v1799
        %2098 = vmatprep.subr.mxu0 0.0
        %2099 = vmatpush2.xpose.msra.mxu0 %v1796
        %2100 = vmatprep.subr.mxu0 0.0
        %2101 = vmatpush2.xpose.msra.mxu0 %v1793
        %2102 = vmatprep.subr.mxu0 0.0
        %2103 = vmatpush2.xpose.msra.mxu0 %v1790
        %2104 = vmatprep.subr.mxu0 0.0
        %2105 = vmatpush2.xpose.msra.mxu0 %v1787
        %2106 = vmatprep.subr.mxu0 0.0
        %2107 = vmatpush2.xpose.msra.mxu0 %v1784
        %2108 = vmatprep.mubr.f32.mxu0 0.0
        %2109 = vmatmul.mubr.f32.gmra.mxu0 %v1445
        %v2110 = vpop.f32.mrf.mxu0
        %v2111 = vadd.f32 %v1434, %v2110
        %v2112 = vpop.f32.mrf.mxu0
        %v2113 = vadd.f32 %v1436, %v2112
        %2114 = vdwg.mxu0
        %v2115 = vld [vmem:[%s5] sm:$0xff]
        %2117 = vset.pattern.permute.xlu0 0
        %2118 = vperm.xlu0 %2117, %v2115
        %v2119 = vpop.permute.xlu0 %2118
        %v2121 = vadd.f32 %v1898, %v2119
        %v2122 = vadd.f32 %v1900, %v2119
        %v2123 = vadd.f32 %v1969, %v2119
        %v2124 = vadd.f32 %v1971, %v2119
        %v2125 = vadd.f32 %v2040, %v2119
        %v2126 = vadd.f32 %v2042, %v2119
        %v2127 = vadd.f32 %v2111, %v2119
        %v2128 = vadd.f32 %v2113, %v2119
        %v2129 = vxor.u32 %v2121, 2147483648
        %v2130 = vxor.u32 %v2122, 2147483648
        %v2131 = vxor.u32 %v2123, 2147483648
        %v2132 = vxor.u32 %v2124, 2147483648
        %v2133 = vxor.u32 %v2125, 2147483648
        %v2134 = vxor.u32 %v2126, 2147483648
        %v2135 = vxor.u32 %v2127, 2147483648
        %v2136 = vxor.u32 %v2128, 2147483648
        %v2137 = vmul.f32 %v2129, 1.442695
        %v2138 = vpow.pop %v2137
        %v2139 = vmul.f32 %v2130, 1.442695
        %v2140 = vpow.pop %v2139
        %v2141 = vmul.f32 %v2131, 1.442695
        %v2142 = vpow.pop %v2141
        %v2143 = vmul.f32 %v2132, 1.442695
        %v2144 = vpow.pop %v2143
        %v2145 = vmul.f32 %v2133, 1.442695
        %v2146 = vpow.pop %v2145
        %v2147 = vmul.f32 %v2134, 1.442695
        %v2148 = vpow.pop %v2147
        %v2149 = vmul.f32 %v2135, 1.442695
        %v2150 = vpow.pop %v2149
        %v2151 = vmul.f32 %v2136, 1.442695
        %v2152 = vpow.pop %v2151
        %v2153 = vadd.f32 %v2138, 1.0
        %v2154 = vadd.f32 %v2140, 1.0
        %v2155 = vadd.f32 %v2142, 1.0
        %v2156 = vadd.f32 %v2144, 1.0
        %v2157 = vadd.f32 %v2146, 1.0
        %v2158 = vadd.f32 %v2148, 1.0
        %v2159 = vadd.f32 %v2150, 1.0
        %v2160 = vadd.f32 %v2152, 1.0
        %v2161 = vrcp.pop %v2153
        %v2162 = vmul.f32 1.0, %v2161
        %v2163 = vrcp.pop %v2154
        %v2164 = vmul.f32 1.0, %v2163
        %v2165 = vrcp.pop %v2155
        %v2166 = vmul.f32 1.0, %v2165
        %v2167 = vrcp.pop %v2156
        %v2168 = vmul.f32 1.0, %v2167
        %v2169 = vrcp.pop %v2157
        %v2170 = vmul.f32 1.0, %v2169
        %v2171 = vrcp.pop %v2158
        %v2172 = vmul.f32 1.0, %v2171
        %v2173 = vrcp.pop %v2159
        %v2174 = vmul.f32 1.0, %v2173
        %v2175 = vrcp.pop %v2160
        %v2176 = vmul.f32 1.0, %v2175
        %v2177 = vld [vmem:[%s6] sm:$0xff]
        %2179 = vset.pattern.permute.xlu0 0
        %2180 = vperm.xlu0 %2179, %v2177
        %v2181 = vpop.permute.xlu0 %2180
        %v2183 = vadd.f32 %v1209, %v2181
        %v2184 = vadd.f32 %v1211, %v2181
        %v2185 = vadd.f32 %v1286, %v2181
        %v2186 = vadd.f32 %v1288, %v2181
        %v2187 = vadd.f32 %v1363, %v2181
        %v2188 = vadd.f32 %v1365, %v2181
        %v2189 = vadd.f32 %v1440, %v2181
        %v2190 = vadd.f32 %v1442, %v2181
        %v2191 = vmul.f32 %v2162, %v2183
        %v2192 = vmul.f32 %v2164, %v2184
        %v2193 = vmul.f32 %v2166, %v2185
        %v2194 = vmul.f32 %v2168, %v2186
        %v2195 = vmul.f32 %v2170, %v2187
        %v2196 = vmul.f32 %v2172, %v2188
        %v2197 = vmul.f32 %v2174, %v2189
        %v2198 = vmul.f32 %v2176, %v2190
        %2199 = vst [vmem:[%s421] sm:$0xff] %v2191
        %2200 = vst [vmem:[%s421 + $0x8] sm:$0xff] %v2192
        %2201 = vst [vmem:[%s421 + $0x10] sm:$0xff] %v2193
        %2202 = vst [vmem:[%s421 + $0x18] sm:$0xff] %v2194
        %2203 = vst [vmem:[%s421 + $0x20] sm:$0xff] %v2195
        %2204 = vst [vmem:[%s421 + $0x28] sm:$0xff] %v2196
        %2205 = vst [vmem:[%s421 + $0x30] sm:$0xff] %v2197
        %2206 = vst [vmem:[%s421 + $0x38] sm:$0xff] %v2198
        %v2207 = vld [vmem:[%s429] sm:$0xff]
        %vm2208 = vcmp.lt.s32.totalorder %v2207, 5
        %v2209 = vsel %vm2208, 1, 0
        %v2210 = vlaneseq
        %v2211 = vshrl.u32 %v2210, 7
        %v2212 = vsub.s32 0, %v2211
        %v2213 = vrot.slane %v2209, %v2212
        %v2214 = vlaneseq
        %v2215 = vshrl.u32 %v2214, 7
        %v2216 = vsub.s32 1, %v2215
        %v2217 = vrot.slane %v2209, %v2216
        %v2218 = vlaneseq
        %v2219 = vshrl.u32 %v2218, 7
        %v2220 = vsub.s32 2, %v2219
        %v2221 = vrot.slane %v2209, %v2220
        %v2222 = vlaneseq
        %v2223 = vshrl.u32 %v2222, 7
        %v2224 = vsub.s32 3, %v2223
        %v2225 = vrot.slane %v2209, %v2224
        %v2226 = vlaneseq
        %v2227 = vshrl.u32 %v2226, 7
        %v2228 = vsub.s32 4, %v2227
        %v2229 = vrot.slane %v2209, %v2228
        %v2230 = vlaneseq
        %v2231 = vshrl.u32 %v2230, 7
        %v2232 = vsub.s32 5, %v2231
        %v2233 = vrot.slane %v2209, %v2232
        %v2234 = vlaneseq
        %v2235 = vshrl.u32 %v2234, 7
        %v2236 = vsub.s32 6, %v2235
        %v2237 = vrot.slane %v2209, %v2236
        %v2238 = vlaneseq
        %v2239 = vshrl.u32 %v2238, 7
        %v2240 = vsub.s32 7, %v2239
        %v2241 = vrot.slane %v2209, %v2240
        %vm2242 = vcmp.eq.s32.totalorder %v2213, 1
        %vm2243 = vcmp.eq.s32.totalorder %v2217, 1
        %vm2244 = vcmp.eq.s32.totalorder %v2221, 1
        %vm2245 = vcmp.eq.s32.totalorder %v2225, 1
        %vm2246 = vcmp.eq.s32.totalorder %v2229, 1
        %vm2247 = vcmp.eq.s32.totalorder %v2233, 1
        %vm2248 = vcmp.eq.s32.totalorder %v2237, 1
        %vm2249 = vcmp.eq.s32.totalorder %v2241, 1
        %v2250 = vsel %vm2242, %v2191, 0.0
        %v2251 = vsel %vm2243, %v2192, 0.0
        %v2252 = vsel %vm2244, %v2193, 0.0
        %v2253 = vsel %vm2245, %v2194, 0.0
        %v2254 = vsel %vm2246, %v2195, 0.0
        %v2255 = vsel %vm2247, %v2196, 0.0
        %v2256 = vsel %vm2248, %v2197, 0.0
        %v2257 = vsel %vm2249, %v2198, 0.0
        %v2258 = vlaneseq
        %v2259 = vshrl.u32 %v2258, 7
        %v2260 = vlaneseq
        %v2261 = vshrl.u32 %v2260, 7
        %v2262 = vsub.s32 0, %v2261
        %v2263 = vrot.slane %v2207, %v2262
        %v2264 = vlaneseq
        %v2265 = vshrl.u32 %v2264, 7
        %v2266 = vsub.s32 1, %v2265
        %v2267 = vrot.slane %v2207, %v2266
        %v2268 = vlaneseq
        %v2269 = vshrl.u32 %v2268, 7
        %v2270 = vsub.s32 2, %v2269
        %v2271 = vrot.slane %v2207, %v2270
        %v2272 = vlaneseq
        %v2273 = vshrl.u32 %v2272, 7
        %v2274 = vsub.s32 3, %v2273
        %v2275 = vrot.slane %v2207, %v2274
        %v2276 = vlaneseq
        %v2277 = vshrl.u32 %v2276, 7
        %v2278 = vsub.s32 4, %v2277
        %v2279 = vrot.slane %v2207, %v2278
        %v2280 = vlaneseq
        %v2281 = vshrl.u32 %v2280, 7
        %v2282 = vsub.s32 5, %v2281
        %v2283 = vrot.slane %v2207, %v2282
        %v2284 = vlaneseq
        %v2285 = vshrl.u32 %v2284, 7
        %v2286 = vsub.s32 6, %v2285
        %v2287 = vrot.slane %v2207, %v2286
        %v2288 = vlaneseq
        %v2289 = vshrl.u32 %v2288, 7
        %v2290 = vsub.s32 7, %v2289
        %v2291 = vrot.slane %v2207, %v2290
        %vm2292 = vcmp.eq.s32.totalorder %v2259, %v2263
        %vm2293 = vcmp.eq.s32.totalorder %v2259, %v2267
        %vm2294 = vcmp.eq.s32.totalorder %v2259, %v2271
        %vm2295 = vcmp.eq.s32.totalorder %v2259, %v2275
        %vm2296 = vcmp.eq.s32.totalorder %v2259, %v2279
        %vm2297 = vcmp.eq.s32.totalorder %v2259, %v2283
        %vm2298 = vcmp.eq.s32.totalorder %v2259, %v2287
        %vm2299 = vcmp.eq.s32.totalorder %v2259, %v2291
        %v2300 = vsel %vm2292, 1, 0
        %v2301 = vsel %vm2293, 1, 0
        %v2302 = vsel %vm2294, 1, 0
        %v2303 = vsel %vm2295, 1, 0
        %v2304 = vsel %vm2296, 1, 0
        %v2305 = vsel %vm2297, 1, 0
        %v2306 = vsel %vm2298, 1, 0
        %v2307 = vsel %vm2299, 1, 0
        %v2308 = vcvt.s32.f32 %v2300
        %v2309 = vcvt.s32.f32 %v2301
        %v2310 = vcvt.s32.f32 %v2302
        %v2311 = vcvt.s32.f32 %v2303
        %v2312 = vcvt.s32.f32 %v2304
        %v2313 = vcvt.s32.f32 %v2305
        %v2314 = vcvt.s32.f32 %v2306
        %v2315 = vcvt.s32.f32 %v2307
        %v2316 = vld [vmem:[#allocation2] sm:$0xff]
        %2317 = vmatprep.subr.mxu0 0.0
        %2318 = vmatpush1.xpose.msra.mxu0 0.0
        %2319 = vmatprep.subr.mxu0 0.0
        %2320 = vmatpush1.xpose.msra.mxu0 0.0
        %2321 = vmatprep.subr.mxu0 0.0
        %2322 = vmatpush1.xpose.msra.mxu0 0.0
        %2323 = vmatprep.subr.mxu0 0.0
        %2324 = vmatpush1.xpose.msra.mxu0 0.0
        %2325 = vmatprep.subr.mxu0 0.0
        %2326 = vmatpush1.xpose.msra.mxu0 0.0
        %2327 = vmatprep.subr.mxu0 0.0
        %2328 = vmatpush1.xpose.msra.mxu0 0.0
        %2329 = vmatprep.subr.mxu0 0.0
        %2330 = vmatpush1.xpose.msra.mxu0 0.0
        %2331 = vmatprep.subr.mxu0 0.0
        %2332 = vmatpush1.xpose.msra.mxu0 0.0
        %2333 = vmatprep.subr.mxu0 0.0
        %2334 = vmatpush1.xpose.msra.mxu0 0.0
        %2335 = vmatprep.subr.mxu0 0.0
        %2336 = vmatpush1.xpose.msra.mxu0 0.0
        %2337 = vmatprep.subr.mxu0 0.0
        %2338 = vmatpush1.xpose.msra.mxu0 0.0
        %2339 = vmatprep.subr.mxu0 0.0
        %2340 = vmatpush1.xpose.msra.mxu0 0.0
        %2341 = vmatprep.subr.mxu0 0.0
        %2342 = vmatpush1.xpose.msra.mxu0 0.0
        %2343 = vmatprep.subr.mxu0 0.0
        %2344 = vmatpush1.xpose.msra.mxu0 0.0
        %2345 = vmatprep.subr.mxu0 0.0
        %2346 = vmatpush1.xpose.msra.mxu0 0.0
        %2347 = vmatprep.subr.mxu0 %v2251
        %2348 = vmatpush1.xpose.msra.mxu0 %v2250
        %2349 = vmatprep.subr.mxu0 0.0
        %2350 = vmatpush2.xpose.msra.mxu0 0.0
        %2351 = vmatprep.subr.mxu0 0.0
        %2352 = vmatpush2.xpose.msra.mxu0 0.0
        %2353 = vmatprep.subr.mxu0 0.0
        %2354 = vmatpush2.xpose.msra.mxu0 0.0
        %2355 = vmatprep.subr.mxu0 0.0
        %2356 = vmatpush2.xpose.msra.mxu0 0.0
        %2357 = vmatprep.subr.mxu0 0.0
        %2358 = vmatpush2.xpose.msra.mxu0 0.0
        %2359 = vmatprep.subr.mxu0 0.0
        %2360 = vmatpush2.xpose.msra.mxu0 0.0
        %2361 = vmatprep.subr.mxu0 0.0
        %2362 = vmatpush2.xpose.msra.mxu0 0.0
        %2363 = vmatprep.subr.mxu0 0.0
        %2364 = vmatpush2.xpose.msra.mxu0 0.0
        %2365 = vmatprep.subr.mxu0 0.0
        %2366 = vmatpush2.xpose.msra.mxu0 0.0
        %2367 = vmatprep.subr.mxu0 0.0
        %2368 = vmatpush2.xpose.msra.mxu0 0.0
        %2369 = vmatprep.subr.mxu0 0.0
        %2370 = vmatpush2.xpose.msra.mxu0 0.0
        %2371 = vmatprep.subr.mxu0 0.0
        %2372 = vmatpush2.xpose.msra.mxu0 0.0
        %2373 = vmatprep.subr.mxu0 0.0
        %2374 = vmatpush2.xpose.msra.mxu0 0.0
        %2375 = vmatprep.subr.mxu0 0.0
        %2376 = vmatpush2.xpose.msra.mxu0 0.0
        %2377 = vmatprep.subr.mxu0 0.0
        %2378 = vmatpush2.xpose.msra.mxu0 0.0
        %2379 = vmatprep.subr.mxu0 0.0
        %2380 = vmatpush2.xpose.msra.mxu0 0.0
        %2381 = vmatprep.mubr.f32.mxu0 %v2309
        %2382 = vmatmul.mubr.f32.gmra.mxu0 %v2308
        %v2383 = vpop.f32.mrf.mxu0
        %v2384 = vadd.f32 0.0, %v2383
        %v2385 = vpop.f32.mrf.mxu0
        %2386 = vdwg.mxu0
        %2387 = vmatprep.subr.mxu0 0.0
        %2388 = vmatpush1.xpose.msra.mxu0 0.0
        %2389 = vmatprep.subr.mxu0 0.0
        %2390 = vmatpush1.xpose.msra.mxu0 0.0
        %2391 = vmatprep.subr.mxu0 0.0
        %2392 = vmatpush1.xpose.msra.mxu0 0.0
        %2393 = vmatprep.subr.mxu0 0.0
        %2394 = vmatpush1.xpose.msra.mxu0 0.0
        %2395 = vmatprep.subr.mxu0 0.0
        %2396 = vmatpush1.xpose.msra.mxu0 0.0
        %2397 = vmatprep.subr.mxu0 0.0
        %2398 = vmatpush1.xpose.msra.mxu0 0.0
        %2399 = vmatprep.subr.mxu0 0.0
        %2400 = vmatpush1.xpose.msra.mxu0 0.0
        %2401 = vmatprep.subr.mxu0 0.0
        %2402 = vmatpush1.xpose.msra.mxu0 0.0
        %2403 = vmatprep.subr.mxu0 0.0
        %2404 = vmatpush1.xpose.msra.mxu0 0.0
        %2405 = vmatprep.subr.mxu0 0.0
        %2406 = vmatpush1.xpose.msra.mxu0 0.0
        %2407 = vmatprep.subr.mxu0 0.0
        %2408 = vmatpush1.xpose.msra.mxu0 0.0
        %2409 = vmatprep.subr.mxu0 0.0
        %2410 = vmatpush1.xpose.msra.mxu0 0.0
        %2411 = vmatprep.subr.mxu0 0.0
        %2412 = vmatpush1.xpose.msra.mxu0 0.0
        %2413 = vmatprep.subr.mxu0 0.0
        %2414 = vmatpush1.xpose.msra.mxu0 0.0
        %2415 = vmatprep.subr.mxu0 0.0
        %2416 = vmatpush1.xpose.msra.mxu0 0.0
        %2417 = vmatprep.subr.mxu0 %v2253
        %2418 = vmatpush1.xpose.msra.mxu0 %v2252
        %2419 = vmatprep.subr.mxu0 0.0
        %2420 = vmatpush2.xpose.msra.mxu0 0.0
        %2421 = vmatprep.subr.mxu0 0.0
        %2422 = vmatpush2.xpose.msra.mxu0 0.0
        %2423 = vmatprep.subr.mxu0 0.0
        %2424 = vmatpush2.xpose.msra.mxu0 0.0
        %2425 = vmatprep.subr.mxu0 0.0
        %2426 = vmatpush2.xpose.msra.mxu0 0.0
        %2427 = vmatprep.subr.mxu0 0.0
        %2428 = vmatpush2.xpose.msra.mxu0 0.0
        %2429 = vmatprep.subr.mxu0 0.0
        %2430 = vmatpush2.xpose.msra.mxu0 0.0
        %2431 = vmatprep.subr.mxu0 0.0
        %2432 = vmatpush2.xpose.msra.mxu0 0.0
        %2433 = vmatprep.subr.mxu0 0.0
        %2434 = vmatpush2.xpose.msra.mxu0 0.0
        %2435 = vmatprep.subr.mxu0 0.0
        %2436 = vmatpush2.xpose.msra.mxu0 0.0
        %2437 = vmatprep.subr.mxu0 0.0
        %2438 = vmatpush2.xpose.msra.mxu0 0.0
        %2439 = vmatprep.subr.mxu0 0.0
        %2440 = vmatpush2.xpose.msra.mxu0 0.0
        %2441 = vmatprep.subr.mxu0 0.0
        %2442 = vmatpush2.xpose.msra.mxu0 0.0
        %2443 = vmatprep.subr.mxu0 0.0
        %2444 = vmatpush2.xpose.msra.mxu0 0.0
        %2445 = vmatprep.subr.mxu0 0.0
        %2446 = vmatpush2.xpose.msra.mxu0 0.0
        %2447 = vmatprep.subr.mxu0 0.0
        %2448 = vmatpush2.xpose.msra.mxu0 0.0
        %2449 = vmatprep.subr.mxu0 0.0
        %2450 = vmatpush2.xpose.msra.mxu0 0.0
        %2451 = vmatprep.mubr.f32.mxu0 %v2311
        %2452 = vmatmul.mubr.f32.gmra.mxu0 %v2310
        %v2453 = vpop.f32.mrf.mxu0
        %v2454 = vadd.f32 %v2384, %v2453
        %v2455 = vpop.f32.mrf.mxu0
        %2456 = vdwg.mxu0
        %2457 = vmatprep.subr.mxu0 0.0
        %2458 = vmatpush1.xpose.msra.mxu0 0.0
        %2459 = vmatprep.subr.mxu0 0.0
        %2460 = vmatpush1.xpose.msra.mxu0 0.0
        %2461 = vmatprep.subr.mxu0 0.0
        %2462 = vmatpush1.xpose.msra.mxu0 0.0
        %2463 = vmatprep.subr.mxu0 0.0
        %2464 = vmatpush1.xpose.msra.mxu0 0.0
        %2465 = vmatprep.subr.mxu0 0.0
        %2466 = vmatpush1.xpose.msra.mxu0 0.0
        %2467 = vmatprep.subr.mxu0 0.0
        %2468 = vmatpush1.xpose.msra.mxu0 0.0
        %2469 = vmatprep.subr.mxu0 0.0
        %2470 = vmatpush1.xpose.msra.mxu0 0.0
        %2471 = vmatprep.subr.mxu0 0.0
        %2472 = vmatpush1.xpose.msra.mxu0 0.0
        %2473 = vmatprep.subr.mxu0 0.0
        %2474 = vmatpush1.xpose.msra.mxu0 0.0
        %2475 = vmatprep.subr.mxu0 0.0
        %2476 = vmatpush1.xpose.msra.mxu0 0.0
        %2477 = vmatprep.subr.mxu0 0.0
        %2478 = vmatpush1.xpose.msra.mxu0 0.0
        %2479 = vmatprep.subr.mxu0 0.0
        %2480 = vmatpush1.xpose.msra.mxu0 0.0
        %2481 = vmatprep.subr.mxu0 0.0
        %2482 = vmatpush1.xpose.msra.mxu0 0.0
        %2483 = vmatprep.subr.mxu0 0.0
        %2484 = vmatpush1.xpose.msra.mxu0 0.0
        %2485 = vmatprep.subr.mxu0 0.0
        %2486 = vmatpush1.xpose.msra.mxu0 0.0
        %2487 = vmatprep.subr.mxu0 %v2255
        %2488 = vmatpush1.xpose.msra.mxu0 %v2254
        %2489 = vmatprep.subr.mxu0 0.0
        %2490 = vmatpush2.xpose.msra.mxu0 0.0
        %2491 = vmatprep.subr.mxu0 0.0
        %2492 = vmatpush2.xpose.msra.mxu0 0.0
        %2493 = vmatprep.subr.mxu0 0.0
        %2494 = vmatpush2.xpose.msra.mxu0 0.0
        %2495 = vmatprep.subr.mxu0 0.0
        %2496 = vmatpush2.xpose.msra.mxu0 0.0
        %2497 = vmatprep.subr.mxu0 0.0
        %2498 = vmatpush2.xpose.msra.mxu0 0.0
        %2499 = vmatprep.subr.mxu0 0.0
        %2500 = vmatpush2.xpose.msra.mxu0 0.0
        %2501 = vmatprep.subr.mxu0 0.0
        %2502 = vmatpush2.xpose.msra.mxu0 0.0
        %2503 = vmatprep.subr.mxu0 0.0
        %2504 = vmatpush2.xpose.msra.mxu0 0.0
        %2505 = vmatprep.subr.mxu0 0.0
        %2506 = vmatpush2.xpose.msra.mxu0 0.0
        %2507 = vmatprep.subr.mxu0 0.0
        %2508 = vmatpush2.xpose.msra.mxu0 0.0
        %2509 = vmatprep.subr.mxu0 0.0
        %2510 = vmatpush2.xpose.msra.mxu0 0.0
        %2511 = vmatprep.subr.mxu0 0.0
        %2512 = vmatpush2.xpose.msra.mxu0 0.0
        %2513 = vmatprep.subr.mxu0 0.0
        %2514 = vmatpush2.xpose.msra.mxu0 0.0
        %2515 = vmatprep.subr.mxu0 0.0
        %2516 = vmatpush2.xpose.msra.mxu0 0.0
        %2517 = vmatprep.subr.mxu0 0.0
        %2518 = vmatpush2.xpose.msra.mxu0 0.0
        %2519 = vmatprep.subr.mxu0 0.0
        %2520 = vmatpush2.xpose.msra.mxu0 0.0
        %2521 = vmatprep.mubr.f32.mxu0 %v2313
        %2522 = vmatmul.mubr.f32.gmra.mxu0 %v2312
        %v2523 = vpop.f32.mrf.mxu0
        %v2524 = vadd.f32 %v2454, %v2523
        %v2525 = vpop.f32.mrf.mxu0
        %2526 = vdwg.mxu0
        %2527 = vmatprep.subr.mxu0 0.0
        %2528 = vmatpush1.xpose.msra.mxu0 0.0
        %2529 = vmatprep.subr.mxu0 0.0
        %2530 = vmatpush1.xpose.msra.mxu0 0.0
        %2531 = vmatprep.subr.mxu0 0.0
        %2532 = vmatpush1.xpose.msra.mxu0 0.0
        %2533 = vmatprep.subr.mxu0 0.0
        %2534 = vmatpush1.xpose.msra.mxu0 0.0
        %2535 = vmatprep.subr.mxu0 0.0
        %2536 = vmatpush1.xpose.msra.mxu0 0.0
        %2537 = vmatprep.subr.mxu0 0.0
        %2538 = vmatpush1.xpose.msra.mxu0 0.0
        %2539 = vmatprep.subr.mxu0 0.0
        %2540 = vmatpush1.xpose.msra.mxu0 0.0
        %2541 = vmatprep.subr.mxu0 0.0
        %2542 = vmatpush1.xpose.msra.mxu0 0.0
        %2543 = vmatprep.subr.mxu0 0.0
        %2544 = vmatpush1.xpose.msra.mxu0 0.0
        %2545 = vmatprep.subr.mxu0 0.0
        %2546 = vmatpush1.xpose.msra.mxu0 0.0
        %2547 = vmatprep.subr.mxu0 0.0
        %2548 = vmatpush1.xpose.msra.mxu0 0.0
        %2549 = vmatprep.subr.mxu0 0.0
        %2550 = vmatpush1.xpose.msra.mxu0 0.0
        %2551 = vmatprep.subr.mxu0 0.0
        %2552 = vmatpush1.xpose.msra.mxu0 0.0
        %2553 = vmatprep.subr.mxu0 0.0
        %2554 = vmatpush1.xpose.msra.mxu0 0.0
        %2555 = vmatprep.subr.mxu0 0.0
        %2556 = vmatpush1.xpose.msra.mxu0 0.0
        %2557 = vmatprep.subr.mxu0 %v2257
        %2558 = vmatpush1.xpose.msra.mxu0 %v2256
        %2559 = vmatprep.subr.mxu0 0.0
        %2560 = vmatpush2.xpose.msra.mxu0 0.0
        %2561 = vmatprep.subr.mxu0 0.0
        %2562 = vmatpush2.xpose.msra.mxu0 0.0
        %2563 = vmatprep.subr.mxu0 0.0
        %2564 = vmatpush2.xpose.msra.mxu0 0.0
        %2565 = vmatprep.subr.mxu0 0.0
        %2566 = vmatpush2.xpose.msra.mxu0 0.0
        %2567 = vmatprep.subr.mxu0 0.0
        %2568 = vmatpush2.xpose.msra.mxu0 0.0
        %2569 = vmatprep.subr.mxu0 0.0
        %2570 = vmatpush2.xpose.msra.mxu0 0.0
        %2571 = vmatprep.subr.mxu0 0.0
        %2572 = vmatpush2.xpose.msra.mxu0 0.0
        %2573 = vmatprep.subr.mxu0 0.0
        %2574 = vmatpush2.xpose.msra.mxu0 0.0
        %2575 = vmatprep.subr.mxu0 0.0
        %2576 = vmatpush2.xpose.msra.mxu0 0.0
        %2577 = vmatprep.subr.mxu0 0.0
        %2578 = vmatpush2.xpose.msra.mxu0 0.0
        %2579 = vmatprep.subr.mxu0 0.0
        %2580 = vmatpush2.xpose.msra.mxu0 0.0
        %2581 = vmatprep.subr.mxu0 0.0
        %2582 = vmatpush2.xpose.msra.mxu0 0.0
        %2583 = vmatprep.subr.mxu0 0.0
        %2584 = vmatpush2.xpose.msra.mxu0 0.0
        %2585 = vmatprep.subr.mxu0 0.0
        %2586 = vmatpush2.xpose.msra.mxu0 0.0
        %2587 = vmatprep.subr.mxu0 0.0
        %2588 = vmatpush2.xpose.msra.mxu0 0.0
        %2589 = vmatprep.subr.mxu0 0.0
        %2590 = vmatpush2.xpose.msra.mxu0 0.0
        %2591 = vmatprep.mubr.f32.mxu0 %v2315
        %2592 = vmatmul.mubr.f32.gmra.mxu0 %v2314
        %v2593 = vpop.f32.mrf.mxu0
        %v2594 = vadd.f32 %v2524, %v2593
        %v2595 = vpop.f32.mrf.mxu0
        %2596 = vdwg.mxu0
        %v2597 = vadd.f32 %v2316, %v2594
        %vm2598 = vcmask 64512
        %2599 = vst.msk [vmem:[#allocation2] sm:$0xff] %vm2598, %v2597
        %p2600 = scmp.eq.s32.totalorder %s29, 2
        // Predicated region
        $region53: #{tpu_custom_call.1} parent=47 // pred_check
          %p2601 = pneg %p2600
        $region54: #{tpu_custom_call.1} parent=47 // pred_check_branch
          %2603 = sbr.rel (%p2601) target = $region56
        $region55: #{tpu_custom_call.1} parent=47 // pred_region
          %v2604 = vld [vmem:[#allocation2] sm:$0xff]
          %2605 = vst.msk [vmem:[#allocation5] sm:$0xff] %vm2598, %v2604
        $region56: #{tpu_custom_call.1} parent=47 // pred_fallthru
          _
        %s2606 = sand.u32 %s230, 1
        %s2607 = scalar_lea.sflag [#allocation4], %s2606
        %s2608 = sand.u32 %s230, 1
        %s2609 = smul.addr %s2608, 64
        %s2610 = scalar_lea.vmem [#allocation3], %s2609
        // Predicated region
        $region57: #{tpu_custom_call.1} parent=47 // pred_check
          %p2611 = pneg %p240
        $region58: #{tpu_custom_call.1} parent=47 // pred_check_branch
          %2613 = sbr.rel (%p2611) target = $region60
        $region59: #{tpu_custom_call.1} parent=47 // pred_region
          %s2614 = smul.u32 %s28, 3
          %s2615 = sadd.s32 %s2614, %s29
          %s2616 = smul.u32 8, %s2615
          %s2618 = ssub.s32 1024, 1024
          %2619 = vsyncadd %s2607, %s2618
          %s2620 = smul.addr %s2616, 128
          %s2621 = scalar_lea.hbm %s7, %s2620
          %s2623 = sshll.u32 %s2610, 4
          %s2624 = int_to_ptr.vmem [resolvable:$true] %s2623
          %2626 = dma.vmem_to_hbm [thread:$0]  %s2624, 1024, %s2621, %s2607
        $region60: #{tpu_custom_call.1} parent=47 // pred_fallthru
          _
        // Predicated region
        $region61: #{tpu_custom_call.1} parent=47 // pred_check
          %p2627 = pneg %p266
        $region62: #{tpu_custom_call.1} parent=47 // pred_check_branch
          %2629 = sbr.rel (%p2627) target = $region64
        $region63: #{tpu_custom_call.1} parent=47 // pred_region
          %s2631 = ssub.s32 128, 128
          %2632 = vsyncadd [#allocation6], %s2631
          %s2633 = smul.addr %s28, 128
          %s2634 = scalar_lea.hbm %s8, %s2633
          %s2636 = sshll.u32 [#allocation5], 4
          %s2637 = int_to_ptr.vmem [resolvable:$true] %s2636
          %2639 = dma.vmem_to_hbm [thread:$0]  %s2637, 128, %s2634, [#allocation6]
        $region64: #{tpu_custom_call.1} parent=47 // pred_fallthru
          _
        // Predicated region
        $region65: #{tpu_custom_call.1} parent=47 // pred_check
          %p2640 = pneg %p266
        $region66: #{tpu_custom_call.1} parent=47 // pred_check_branch
          %2642 = sbr.rel (%p2640) target = $region68
        $region67: #{tpu_custom_call.1} parent=47 // pred_region
          %2643 = dma.done [#allocation6], 128
        $region68: #{tpu_custom_call.1} parent=47 // pred_fallthru
          _
      $region48: #{tpu_custom_call.1} parent=5 // pred_fallthru
        _
      %p2644 = scmp.le.s32.totalorder 2, %s19
      // Predicated region
      $region69: #{tpu_custom_call.1} parent=5 // pred_check
        %p2645 = pneg %p2644
      $region70: #{tpu_custom_call.1} parent=5 // pred_check_branch
        %2647 = sbr.rel (%p2645) target = $region72
      $region71: #{tpu_custom_call.1} parent=5 // pred_region
        %s2648 = ssub.s32 %s19, 2
        // Predicated region
        $region73: #{tpu_custom_call.1} parent=71 // pred_check
          %p2649 = pneg %p246
        $region74: #{tpu_custom_call.1} parent=71 // pred_check_branch
          %2651 = sbr.rel (%p2649) target = $region76
        $region75: #{tpu_custom_call.1} parent=71 // pred_region
          %s2652 = sand.u32 %s231, 1
          %s2653 = scalar_lea.sflag [#allocation4], %s2652
          %s2654 = sand.u32 %s231, 1
          %s2655 = smul.addr %s2654, 64
          %s2656 = scalar_lea.vmem [#allocation3], %s2655
          %2657 = dma.done %s2653, 1024
        $region76: #{tpu_custom_call.1} parent=71 // pred_fallthru
          _
      $region72: #{tpu_custom_call.1} parent=5 // pred_fallthru
        _
    $region6: #{tpu_custom_call.1} parent=1 // loop_footer
      %s23 = sadd.s32 1, %s19
    $region7: #{tpu_custom_call.1} parent=1 // loop_footer_branch
      %18 = sbr.rel target = $region3
    $region8: #{tpu_custom_call.1} parent=1 // loop_exit
      _
    %2658 = vsyncpa [#allocation4], 1
    %s2659 = scalar_lea.sflag [#allocation4], 1
    %2660 = vsyncpa %s2659, 1
    %2661 = vsyncpa [#allocation6], 1

</llo_original>
